<compile_context>
chip_gen: v7x
topology: tpu7x:2x2x1
jax: 0.10.0
libtpu: 0.0.40
codegen_flags: <defaults>
</compile_context>

<pallas_src>
import jax
import jax.numpy as jnp
from jax.experimental import pallas as pl
from jax.experimental.pallas import tpu as pltpu

GROUP = 8  # batch rows packed per MXU row via block-diagonal weights


def simnet_kernel(x_ref, w1_ref, b1_ref, w2_ref, b2_ref, w3_ref, b3_ref, o_ref):
    # Grouped layout: each tile row holds GROUP original batch rows laid out
    # side-by-side along lanes; block-diagonal weights keep the groups
    # independent, so this is exactly the per-row MLP of the module.
    x = x_ref[...].astype(jnp.bfloat16)
    h1 = jnp.dot(x, w1_ref[...], preferred_element_type=jnp.float32)
    h1 = jnp.maximum(h1 + b1_ref[...], 0.0)
    h2 = jnp.dot(h1.astype(jnp.bfloat16), w2_ref[...],
                 preferred_element_type=jnp.float32)
    h2 = jnp.maximum(h2 + b2_ref[...], 0.0)
    z = jnp.dot(h2.astype(jnp.bfloat16), w3_ref[...],
                preferred_element_type=jnp.float32) + b3_ref[...]
    # sigmoid(z) = 1 / (1 + exp(-z)); exp and the approx reciprocal both run
    # on the EUP slot, keeping the VALU slot free of an f32 divide.
    o_ref[...] = pl.reciprocal(1.0 + jnp.exp(-z), approx=True).astype(o_ref.dtype)


def _round_up(x, m):
    return (x + m - 1) // m * m


def _block_diag(w, g):
    """(in, out) -> (g*in, g*out) with w repeated along the diagonal."""
    return jnp.kron(jnp.eye(g, dtype=w.dtype), w)


def prepare_params(params, *, group=GROUP):
    """One-time packing: block-diagonal bf16 weights + group-tiled f32 biases."""
    w1, b1, w2, b2, w3, b3 = params
    w1p = _block_diag(w1, group).astype(jnp.bfloat16)
    w2p = _block_diag(w2, group).astype(jnp.bfloat16)
    w3p = _block_diag(w3, group).astype(jnp.bfloat16)
    b1p = jnp.tile(b1.reshape(1, -1), (1, group)).astype(jnp.float32)
    b2p = jnp.tile(b2.reshape(1, -1), (1, group)).astype(jnp.float32)
    b3p = jnp.tile(b3.reshape(1, -1), (1, group)).astype(jnp.float32)
    return (w1p, b1p, w2p, b2p, w3p, b3p)


def _pick_tile_bg(bg, max_tile_bg):
    """Tile over the grouped batch (rows of packed x).

    Tiny batches (<= 256 original rows): a single step, no forced split.
    Otherwise: largest multiple-of-8 tile that still yields >= ~4 grid steps
    (>= 2 per TensorCore on v7x), capped at max_tile_bg (256 -> 2048 rows)."""
    if bg <= 32:
        return _round_up(bg, 8)
    tile = min(max_tile_bg, _round_up(-(-bg // 4), 8))
    return max(tile, 8)


def simnet_forward(x, packed_params, *, group=GROUP, max_tile_bg=256,
                   out_dtype=jnp.float32):
    """x: [B, digit_cap_dim] f32 -> [B, img_h*img_w] sigmoid activations."""
    w1p, b1p, w2p, b2p, w3p, b3p = packed_params
    B, D = x.shape
    GD, GH1 = w1p.shape
    GH2 = w2p.shape[1]
    GOUT = w3p.shape[1]
    assert GD == group * D, "packed params do not match x / group"
    H1, H2, OUT = GH1 // group, GH2 // group, GOUT // group

    # Pad B to a multiple of `group` so (B, D) -> (Bg, group*D) is a free
    # row-major bitcast.  No pad / final slice when B % group == 0.
    Bp = _round_up(B, group)
    if Bp != B:
        x = jnp.pad(x, ((0, Bp - B), (0, 0)))
    Bg = Bp // group
    xg = x.reshape(Bg, GD)

    tile_bg = _pick_tile_bg(Bg, max_tile_bg)
    grid = (pl.cdiv(Bg, tile_bg),)  # partial last block handled by Pallas

    in_specs = [
        pl.BlockSpec((tile_bg, GD), lambda i: (i, 0)),   # packed x (f32)
        pl.BlockSpec((GD, GH1), lambda i: (0, 0)),       # W1 block-diag (bf16)
        pl.BlockSpec((1, GH1), lambda i: (0, 0)),        # b1 tiled (f32)
        pl.BlockSpec((GH1, GH2), lambda i: (0, 0)),      # W2 block-diag (bf16)
        pl.BlockSpec((1, GH2), lambda i: (0, 0)),        # b2 tiled (f32)
        pl.BlockSpec((GH2, GOUT), lambda i: (0, 0)),     # W3 block-diag (bf16)
        pl.BlockSpec((1, GOUT), lambda i: (0, 0)),       # b3 tiled (f32)
    ]
    out_spec = pl.BlockSpec((tile_bg, GOUT), lambda i: (i, 0))

    # Advisory cost (logical flops) so XLA can overlap this call with its
    # neighbors in a larger capsule graph.
    flops = 2 * Bp * (D * H1 + H1 * H2 + H2 * OUT)
    weight_bytes = 2 * (GD * GH1 + GH1 * GH2 + GH2 * GOUT) \
        + 4 * (GH1 + GH2 + GOUT)
    bytes_accessed = Bp * (D + OUT) * 4 + weight_bytes
    cost = pl.CostEstimate(flops=flops, transcendentals=Bp * OUT,
                           bytes_accessed=bytes_accessed)

    out = pl.pallas_call(
        simnet_kernel,
        out_shape=jax.ShapeDtypeStruct((Bg, GOUT), out_dtype),
        grid_spec=pltpu.PrefetchScalarGridSpec(
            num_scalar_prefetch=0,
            grid=grid,
            in_specs=in_specs,
            out_specs=out_spec,
        ),
        compiler_params=pltpu.CompilerParams(
            dimension_semantics=("parallel",),
            # Footprint at tile_bg=256: ~4 MiB double-buffered out tiles,
            # ~2.5 MiB resident packed bf16 weights, ~3 MiB f32 temps —
            # comfortably under 32 MiB on v5e/v6e/v7x alike.
            vmem_limit_bytes=32 * 1024 * 1024,
        ),
        cost_estimate=cost,
    )(xg, w1p, b1p, w2p, b2p, w3p, b3p)

    out = out.reshape(Bp, OUT)  # free row-major un-grouping in HBM
    return out if Bp == B else out[:B]


def init_params(key, digit_cap_dim, h1, h2, img_h, img_w):
    """Deterministic synthetic weights (mimics nn.Linear default uniform init)."""
    def linear_init(k, fan_in, fan_out):
        kw, kb = jax.random.split(k)
        bound = 1.0 / jnp.sqrt(fan_in)
        # stored as [in, out] so forward is x @ W
        w = jax.random.uniform(kw, (fan_in, fan_out), jnp.float32, -bound, bound)
        b = jax.random.uniform(kb, (1, fan_out), jnp.float32, -bound, bound)
        return w, b

    k1, k2, k3 = jax.random.split(key, 3)
    w1, b1 = linear_init(k1, digit_cap_dim, h1)
    w2, b2 = linear_init(k2, h1, h2)
    w3, b3 = linear_init(k3, h2, img_h * img_w)
    return (w1, b1, w2, b2, w3, b3)


def simnet_ref(x, params):
    """Pure-JAX f32 reference of the same forward for a sanity check."""
    w1, b1, w2, b2, w3, b3 = params
    h = jnp.maximum(x @ w1 + b1, 0.0)
    h = jnp.maximum(h @ w2 + b2, 0.0)
    return jax.nn.sigmoid(h @ w3 + b3)


if __name__ == "__main__":
    # Small shapes consistent with the module's hyperparameters.
    B = 20              # deliberately ragged batch of capsule vectors
    digit_cap_dim = 16
    h1, h2 = 32, 32
    img_h = img_w = 16  # output = img_h * img_w = 256

    key = jax.random.PRNGKey(0)
    kx, kp = jax.random.split(key)
    x = jax.random.normal(kx, (B, digit_cap_dim), dtype=jnp.float32)
    params = init_params(kp, digit_cap_dim, h1, h2, img_h, img_w)
    packed = prepare_params(params)   # one-time block-diagonal bf16 packing

    out = simnet_forward(x, packed)
    out = jax.block_until_ready(out)

    ref = simnet_ref(x, params)
    assert out.shape == (B, img_h * img_w)
    # bf16 MXU operands (f32 accumulate) + approx reciprocal -> loosened tol.
    assert jnp.allclose(out, ref, atol=2e-2, rtol=2e-2), float(
        jnp.max(jnp.abs(out - ref)))

    print("KERNEL_OK")
</pallas_src>

<mosaic_0001>
module attributes {stable_mosaic.version = 11 : i64} {
  func.func @simnet_kernel(%arg0: i32, %arg1: memref<8x128xf32, #tpu.memory_space<vmem>>, %arg2: memref<128x256xbf16, #tpu.memory_space<vmem>>, %arg3: memref<1x256xf32, #tpu.memory_space<vmem>>, %arg4: memref<256x256xbf16, #tpu.memory_space<vmem>>, %arg5: memref<1x256xf32, #tpu.memory_space<vmem>>, %arg6: memref<256x2048xbf16, #tpu.memory_space<vmem>>, %arg7: memref<1x2048xf32, #tpu.memory_space<vmem>>, %arg8: memref<8x2048xf32, #tpu.memory_space<vmem>>) attributes {dimension_semantics = [#tpu.dimension_semantics<parallel>], iteration_bounds = array<i64: 1>, scalar_prefetch = 0 : i64, scratch_operands = 0 : i64, tpu.core_type = #tpu.core_type<tc>, window_params = [{transform_indices = @transform_0, window_bounds = array<i64: 8, 128>}, {pipeline_mode = #tpu.pipeline_mode<synchronous>, transform_indices = @transform_1, window_bounds = array<i64: 128, 256>}, {pipeline_mode = #tpu.pipeline_mode<synchronous>, transform_indices = @transform_2, window_bounds = array<i64: 1, 256>}, {pipeline_mode = #tpu.pipeline_mode<synchronous>, transform_indices = @transform_3, window_bounds = array<i64: 256, 256>}, {pipeline_mode = #tpu.pipeline_mode<synchronous>, transform_indices = @transform_4, window_bounds = array<i64: 1, 256>}, {pipeline_mode = #tpu.pipeline_mode<synchronous>, transform_indices = @transform_5, window_bounds = array<i64: 256, 2048>}, {pipeline_mode = #tpu.pipeline_mode<synchronous>, transform_indices = @transform_6, window_bounds = array<i64: 1, 2048>}, {transform_indices = @transform_7, window_bounds = array<i64: 8, 2048>}]} {
    %c0 = arith.constant 0 : index
    %c0_0 = arith.constant 0 : index
    %0 = vector.load %arg1[%c0, %c0_0] : memref<8x128xf32, #tpu.memory_space<vmem>>, vector<8x128xf32>
    %1 = arith.truncf %0 : vector<8x128xf32> to vector<8x128xbf16>
    %c0_1 = arith.constant 0 : index
    %c0_2 = arith.constant 0 : index
    %2 = vector.load %arg2[%c0_1, %c0_2] : memref<128x256xbf16, #tpu.memory_space<vmem>>, vector<128x256xbf16>
    %cst = arith.constant dense<0.000000e+00> : vector<8x256xf32>
    %3 = tpu.matmul %1, %2, %cst {dimension_numbers = #tpu.dot_dimension_numbers<[1], [0], [0], [1], [0, 0, 1, 1], [], []>} : vector<8x128xbf16>, vector<128x256xbf16>, vector<8x256xf32> -> vector<8x256xf32>
    %c0_3 = arith.constant 0 : index
    %c0_4 = arith.constant 0 : index
    %4 = vector.load %arg3[%c0_3, %c0_4] : memref<1x256xf32, #tpu.memory_space<vmem>>, vector<1x256xf32>
    %5 = vector.broadcast %4 : vector<1x256xf32> to vector<8x256xf32>
    %6 = arith.addf %3, %5 : vector<8x256xf32>
    %cst_5 = arith.constant 0.000000e+00 : f32
    %7 = vector.broadcast %cst_5 : f32 to vector<8x256xf32>
    %8 = arith.maximumf %6, %7 : vector<8x256xf32>
    %9 = arith.truncf %8 : vector<8x256xf32> to vector<8x256xbf16>
    %c0_6 = arith.constant 0 : index
    %c0_7 = arith.constant 0 : index
    %10 = vector.load %arg4[%c0_6, %c0_7] : memref<256x256xbf16, #tpu.memory_space<vmem>>, vector<256x256xbf16>
    %cst_8 = arith.constant dense<0.000000e+00> : vector<8x256xf32>
    %11 = tpu.matmul %9, %10, %cst_8 {dimension_numbers = #tpu.dot_dimension_numbers<[1], [0], [0], [1], [0, 0, 1, 1], [], []>} : vector<8x256xbf16>, vector<256x256xbf16>, vector<8x256xf32> -> vector<8x256xf32>
    %c0_9 = arith.constant 0 : index
    %c0_10 = arith.constant 0 : index
    %12 = vector.load %arg5[%c0_9, %c0_10] : memref<1x256xf32, #tpu.memory_space<vmem>>, vector<1x256xf32>
    %13 = vector.broadcast %12 : vector<1x256xf32> to vector<8x256xf32>
    %14 = arith.addf %11, %13 : vector<8x256xf32>
    %cst_11 = arith.constant 0.000000e+00 : f32
    %15 = vector.broadcast %cst_11 : f32 to vector<8x256xf32>
    %16 = arith.maximumf %14, %15 : vector<8x256xf32>
    %17 = arith.truncf %16 : vector<8x256xf32> to vector<8x256xbf16>
    %c0_12 = arith.constant 0 : index
    %c0_13 = arith.constant 0 : index
    %18 = vector.load %arg6[%c0_12, %c0_13] : memref<256x2048xbf16, #tpu.memory_space<vmem>>, vector<256x2048xbf16>
    %cst_14 = arith.constant dense<0.000000e+00> : vector<8x2048xf32>
    %19 = tpu.matmul %17, %18, %cst_14 {dimension_numbers = #tpu.dot_dimension_numbers<[1], [0], [0], [1], [0, 0, 1, 1], [], []>} : vector<8x256xbf16>, vector<256x2048xbf16>, vector<8x2048xf32> -> vector<8x2048xf32>
    %c0_15 = arith.constant 0 : index
    %c0_16 = arith.constant 0 : index
    %20 = vector.load %arg7[%c0_15, %c0_16] : memref<1x2048xf32, #tpu.memory_space<vmem>>, vector<1x2048xf32>
    %21 = vector.broadcast %20 : vector<1x2048xf32> to vector<8x2048xf32>
    %22 = arith.addf %19, %21 : vector<8x2048xf32>
    %cst_17 = arith.constant 0.000000e+00 : f32
    %23 = vector.broadcast %cst_17 : f32 to vector<8x2048xf32>
    %24 = arith.subf %23, %22 : vector<8x2048xf32>
    %25 = math.exp %24 : vector<8x2048xf32>
    %cst_18 = arith.constant 1.000000e+00 : f32
    %26 = vector.broadcast %cst_18 : f32 to vector<8x2048xf32>
    %27 = arith.addf %26, %25 : vector<8x2048xf32>
    %28 = tpu.reciprocal %27 {approx = true} : vector<8x2048xf32> -> vector<8x2048xf32>
    %c0_19 = arith.constant 0 : index
    %c0_20 = arith.constant 0 : index
    %29 = vector.load %arg8[%c0_19, %c0_20] : memref<8x2048xf32, #tpu.memory_space<vmem>>, vector<8x2048xf32>
    tpu.vector_store %arg8[%c0_19, %c0_20], %28 {strides = array<i32>} : memref<8x2048xf32, #tpu.memory_space<vmem>>, vector<8x2048xf32>,
    return
  }
  func.func @transform_0(%arg0: i32) -> (i32, i32) {
    %c0_i32 = arith.constant 0 : i32
    %c0_i32_0 = arith.constant 0 : i32
    return %arg0, %c0_i32 : i32, i32
  }
  func.func @transform_1(%arg0: i32) -> (i32, i32) {
    %c0_i32 = arith.constant 0 : i32
    %c0_i32_0 = arith.constant 0 : i32
    %c0_i32_1 = arith.constant 0 : i32
    return %c0_i32, %c0_i32_0 : i32, i32
  }
  func.func @transform_2(%arg0: i32) -> (i32, i32) {
    %c0_i32 = arith.constant 0 : i32
    %c0_i32_0 = arith.constant 0 : i32
    %c0_i32_1 = arith.constant 0 : i32
    return %c0_i32, %c0_i32_0 : i32, i32
  }
  func.func @transform_3(%arg0: i32) -> (i32, i32) {
    %c0_i32 = arith.constant 0 : i32
    %c0_i32_0 = arith.constant 0 : i32
    %c0_i32_1 = arith.constant 0 : i32
    return %c0_i32, %c0_i32_0 : i32, i32
  }
  func.func @transform_4(%arg0: i32) -> (i32, i32) {
    %c0_i32 = arith.constant 0 : i32
    %c0_i32_0 = arith.constant 0 : i32
    %c0_i32_1 = arith.constant 0 : i32
    return %c0_i32, %c0_i32_0 : i32, i32
  }
  func.func @transform_5(%arg0: i32) -> (i32, i32) {
    %c0_i32 = arith.constant 0 : i32
    %c0_i32_0 = arith.constant 0 : i32
    %c0_i32_1 = arith.constant 0 : i32
    return %c0_i32, %c0_i32_0 : i32, i32
  }
  func.func @transform_6(%arg0: i32) -> (i32, i32) {
    %c0_i32 = arith.constant 0 : i32
    %c0_i32_0 = arith.constant 0 : i32
    %c0_i32_1 = arith.constant 0 : i32
    return %c0_i32, %c0_i32_0 : i32, i32
  }
  func.func @transform_7(%arg0: i32) -> (i32, i32) {
    %c0_i32 = arith.constant 0 : i32
    %c0_i32_0 = arith.constant 0 : i32
    return %arg0, %c0_i32 : i32, i32
  }
}

</mosaic_0001>

<llo_original>
// kernel: tpu_custom_call.1
$region0: #{tpu_custom_call.1}
  #allocation0 [shape = 'u32[]', space=smem, size = 0x4, offset = 0x4, fixed_abs, tag = 'smem constant byte address 0x4 - core index']
  #allocation1 [shape = 'u32[144,128]{1,0:T(1,128)}', space=vmem, size = 0x12000, scoped, tag = 'internal scratch']
  %s0 = inlined_call_operand.hbm [shape: f32[3,128], index: 0, kind: input, shape index: {}]
  %s1 = inlined_call_operand.hbm [shape: bf16[128,256], index: 1, kind: input, shape index: {}]
  %s2 = inlined_call_operand.vmem [shape: f32[1,256], index: 2, kind: input, shape index: {}]
  %s3 = inlined_call_operand.hbm [shape: bf16[256,256], index: 3, kind: input, shape index: {}]
  %s4 = inlined_call_operand.vmem [shape: f32[1,256], index: 4, kind: input, shape index: {}]
  %s5 = inlined_call_operand.hbm [shape: bf16[256,2048], index: 5, kind: input, shape index: {}]
  %s6 = inlined_call_operand.vmem [shape: f32[1,2048], index: 6, kind: input, shape index: {}]
  %s7 = inlined_call_operand.hbm [shape: f32[3,2048], index: 7, kind: output, shape index: {}]
  %s8 = sld [smem:[#allocation0]]
  $region54: #{tpu_custom_call.1} parent=0
    _
  %s10 = ssub.s32 1, %s8
  %s11 = scalar_select 0, %s10, %s8
  $region1: #{tpu_custom_call.1} parent=0
    #allocation2 [shape = 'u8[4096]{0}', space=vmem, size = 0x1000, scoped, tag = 'input window, operand 0, single buffered']
    #allocation3 [shape = 's32[1]{0}', space=sflag, size = 0x4, scoped, tag = 'scoped memory for tpu_custom_call.1']
    #allocation4 [shape = 's32[1]{0}', space=sflag, size = 0x4, scoped, tag = 'scoped memory for tpu_custom_call.1']
    #allocation5 [shape = 'u8[65536]{0}', space=vmem, size = 0x10000, scoped, tag = 'input window, operand 1, single buffered']
    #allocation6 [shape = 's32[1]{0}', space=sflag, size = 0x4, scoped, tag = 'scoped memory for tpu_custom_call.1']
    #allocation7 [shape = 'u8[131072]{0}', space=vmem, size = 0x20000, scoped, tag = 'input window, operand 3, single buffered']
    #allocation8 [shape = 'u8[1048576]{0}', space=vmem, size = 0x100000, scoped, tag = 'input window, operand 5, single buffered']
    #allocation9 [shape = 's32[1]{0}', space=sflag, size = 0x4, scoped, tag = 'scoped memory for tpu_custom_call.1']
    #allocation10 [shape = 'u8[65536]{0}', space=vmem, size = 0x10000, scoped, tag = 'output window, operand 0, single buffered']
    %12 = vsyncpa [#allocation3], 0
    %13 = vsyncpa [#allocation6], 0
    %14 = vsyncpa [#allocation9], 0
    %15 = vsyncpa [#allocation4], 0
    // Predicated region
    $region2: #{tpu_custom_call.1} parent=1 // pred_check
      _
    $region3: #{tpu_custom_call.1} parent=1 // pred_check_branch
      %17 = sbr.rel (0) target = $region5
    $region4: #{tpu_custom_call.1} parent=1 // pred_region
      %s19 = ssub.s32 128, 64
      %20 = vsyncadd [#allocation3], %s19
      %s21 = sshll.u32 [#allocation2], 4
      %s22 = int_to_ptr.vmem [resolvable:$true] %s21
      %27 = dma.hbm_to_vmem [thread:$0]  %s0, 64, %s22, [#allocation3], 64, 64, 4
    $region5: #{tpu_custom_call.1} parent=1 // pred_fallthru
      _
    // Predicated region
    $region6: #{tpu_custom_call.1} parent=1 // pred_check
      _
    $region7: #{tpu_custom_call.1} parent=1 // pred_check_branch
      %29 = sbr.rel (0) target = $region9
    $region8: #{tpu_custom_call.1} parent=1 // pred_region
      %s31 = ssub.s32 2048, 2048
      %32 = vsyncadd [#allocation6], %s31
      %s33 = sshll.u32 [#allocation5], 4
      %s34 = int_to_ptr.vmem [resolvable:$true] %s33
      %39 = dma.hbm_to_vmem [thread:$0]  %s1, 2048, %s34, [#allocation6], 128, 128, 8
    $region9: #{tpu_custom_call.1} parent=1 // pred_fallthru
      _
    // Predicated region
    $region10: #{tpu_custom_call.1} parent=1 // pred_check
      _
    $region11: #{tpu_custom_call.1} parent=1 // pred_check_branch
      %41 = sbr.rel (0) target = $region13
    $region12: #{tpu_custom_call.1} parent=1 // pred_region
      _
    $region13: #{tpu_custom_call.1} parent=1 // pred_fallthru
      _
    // Predicated region
    $region14: #{tpu_custom_call.1} parent=1 // pred_check
      _
    $region15: #{tpu_custom_call.1} parent=1 // pred_check_branch
      %43 = sbr.rel (0) target = $region17
    $region16: #{tpu_custom_call.1} parent=1 // pred_region
      %s45 = ssub.s32 4096, 4096
      %46 = vsyncadd [#allocation6], %s45
      %s47 = sshll.u32 [#allocation7], 4
      %s48 = int_to_ptr.vmem [resolvable:$true] %s47
      %53 = dma.hbm_to_vmem [thread:$0]  %s3, 4096, %s48, [#allocation6], 128, 128, 8
    $region17: #{tpu_custom_call.1} parent=1 // pred_fallthru
      _
    // Predicated region
    $region18: #{tpu_custom_call.1} parent=1 // pred_check
      _
    $region19: #{tpu_custom_call.1} parent=1 // pred_check_branch
      %55 = sbr.rel (0) target = $region21
    $region20: #{tpu_custom_call.1} parent=1 // pred_region
      _
    $region21: #{tpu_custom_call.1} parent=1 // pred_fallthru
      _
    // Predicated region
    $region22: #{tpu_custom_call.1} parent=1 // pred_check
      _
    $region23: #{tpu_custom_call.1} parent=1 // pred_check_branch
      %57 = sbr.rel (0) target = $region25
    $region24: #{tpu_custom_call.1} parent=1 // pred_region
      %s59 = ssub.s32 32768, 32768
      %60 = vsyncadd [#allocation9], %s59
      %s61 = sshll.u32 [#allocation8], 4
      %s62 = int_to_ptr.vmem [resolvable:$true] %s61
      %67 = dma.hbm_to_vmem [thread:$0]  %s5, 32768, %s62, [#allocation9], 1024, 1024, 64
    $region25: #{tpu_custom_call.1} parent=1 // pred_fallthru
      _
    // Predicated region
    $region26: #{tpu_custom_call.1} parent=1 // pred_check
      _
    $region27: #{tpu_custom_call.1} parent=1 // pred_check_branch
      %69 = sbr.rel (0) target = $region29
    $region28: #{tpu_custom_call.1} parent=1 // pred_region
      _
    $region29: #{tpu_custom_call.1} parent=1 // pred_fallthru
      _
    // Predicated region
    $region30: #{tpu_custom_call.1} parent=1 // pred_check
      _
    $region31: #{tpu_custom_call.1} parent=1 // pred_check_branch
      %71 = sbr.rel (0) target = $region33
    $region32: #{tpu_custom_call.1} parent=1 // pred_region
      %72 = dma.done [#allocation3], 128
    $region33: #{tpu_custom_call.1} parent=1 // pred_fallthru
      _
    // Predicated region
    $region34: #{tpu_custom_call.1} parent=1 // pred_check
      _
    $region35: #{tpu_custom_call.1} parent=1 // pred_check_branch
      %74 = sbr.rel (0) target = $region37
    $region36: #{tpu_custom_call.1} parent=1 // pred_region
      %75 = dma.done [#allocation6], 2048
    $region37: #{tpu_custom_call.1} parent=1 // pred_fallthru
      _
    // Predicated region
    $region38: #{tpu_custom_call.1} parent=1 // pred_check
      _
    $region39: #{tpu_custom_call.1} parent=1 // pred_check_branch
      %77 = sbr.rel (0) target = $region41
    $region40: #{tpu_custom_call.1} parent=1 // pred_region
      %78 = dma.done [#allocation6], 4096
    $region41: #{tpu_custom_call.1} parent=1 // pred_fallthru
      _
    // Predicated region
    $region42: #{tpu_custom_call.1} parent=1 // pred_check
      _
    $region43: #{tpu_custom_call.1} parent=1 // pred_check_branch
      %80 = sbr.rel (0) target = $region45
    $region44: #{tpu_custom_call.1} parent=1 // pred_region
      %81 = dma.done [#allocation9], 32768
    $region45: #{tpu_custom_call.1} parent=1 // pred_fallthru
      _
    %v83 = vld [vmem:[#allocation2] sm:$0xff]
    %v84 = vpack.c.bf16 %v83, %v83
    %v85 = vld [vmem:[#allocation5] sm:$0xff]
    %v86 = vld [vmem:[#allocation5 + $0x8] sm:$0xff]
    %v87 = vld [vmem:[#allocation5 + $0x10] sm:$0xff]
    %v88 = vld [vmem:[#allocation5 + $0x18] sm:$0xff]
    %v89 = vld [vmem:[#allocation5 + $0x20] sm:$0xff]
    %v90 = vld [vmem:[#allocation5 + $0x28] sm:$0xff]
    %v91 = vld [vmem:[#allocation5 + $0x30] sm:$0xff]
    %v92 = vld [vmem:[#allocation5 + $0x38] sm:$0xff]
    %v93 = vld [vmem:[#allocation5 + $0x40] sm:$0xff]
    %v94 = vld [vmem:[#allocation5 + $0x48] sm:$0xff]
    %v95 = vld [vmem:[#allocation5 + $0x50] sm:$0xff]
    %v96 = vld [vmem:[#allocation5 + $0x58] sm:$0xff]
    %v97 = vld [vmem:[#allocation5 + $0x60] sm:$0xff]
    %v98 = vld [vmem:[#allocation5 + $0x68] sm:$0xff]
    %v99 = vld [vmem:[#allocation5 + $0x70] sm:$0xff]
    %v100 = vld [vmem:[#allocation5 + $0x78] sm:$0xff]
    %v101 = vld [vmem:[%s2] sm:$0x3]
    %v103 = vlaneseq
    %v104 = vshrl.u32 %v103, 7
    %v105 = vsub.s32 0, %v104
    %v106 = vrot.slane %v101, %v105
    %v107 = vlaneseq
    %v108 = vshrl.u32 %v107, 7
    %v109 = vsub.s32 1, %v108
    %v110 = vrot.slane %v101, %v109
    %v129 = vunpack.c.l.b16 %v85
    %v130 = vunpack.c.h.b16 %v85
    %v131 = vunpack.c.l.b16 %v86
    %v132 = vunpack.c.h.b16 %v86
    %v133 = vunpack.c.l.b16 %v87
    %v134 = vunpack.c.h.b16 %v87
    %v135 = vunpack.c.l.b16 %v88
    %v136 = vunpack.c.h.b16 %v88
    %v137 = vunpack.c.l.b16 %v89
    %v138 = vunpack.c.h.b16 %v89
    %v139 = vunpack.c.l.b16 %v90
    %v140 = vunpack.c.h.b16 %v90
    %v141 = vunpack.c.l.b16 %v91
    %v142 = vunpack.c.h.b16 %v91
    %v143 = vunpack.c.l.b16 %v92
    %v144 = vunpack.c.h.b16 %v92
    %v145 = vunpack.c.l.b16 %v93
    %v146 = vunpack.c.h.b16 %v93
    %v147 = vunpack.c.l.b16 %v94
    %v148 = vunpack.c.h.b16 %v94
    %v149 = vunpack.c.l.b16 %v95
    %v150 = vunpack.c.h.b16 %v95
    %v151 = vunpack.c.l.b16 %v96
    %v152 = vunpack.c.h.b16 %v96
    %v153 = vunpack.c.l.b16 %v97
    %v154 = vunpack.c.h.b16 %v97
    %v155 = vunpack.c.l.b16 %v98
    %v156 = vunpack.c.h.b16 %v98
    %v157 = vunpack.c.l.b16 %v99
    %v158 = vunpack.c.h.b16 %v99
    %v159 = vunpack.c.l.b16 %v100
    %v160 = vunpack.c.h.b16 %v100
    %v161 = vpack.c.b16 %v131, %v129
    %v162 = vpack.c.b16 %v132, %v130
    %v163 = vpack.c.b16 %v135, %v133
    %v164 = vpack.c.b16 %v136, %v134
    %v165 = vpack.c.b16 %v139, %v137
    %v166 = vpack.c.b16 %v140, %v138
    %v167 = vpack.c.b16 %v143, %v141
    %v168 = vpack.c.b16 %v144, %v142
    %v169 = vpack.c.b16 %v147, %v145
    %v170 = vpack.c.b16 %v148, %v146
    %v171 = vpack.c.b16 %v151, %v149
    %v172 = vpack.c.b16 %v152, %v150
    %v173 = vpack.c.b16 %v155, %v153
    %v174 = vpack.c.b16 %v156, %v154
    %v175 = vpack.c.b16 %v159, %v157
    %v176 = vpack.c.b16 %v160, %v158
    %193 = vmatprep.subr.bf16.mxu0 %v162
    %194 = vmatpush1.bf16.msra.mxu0 %v161
    %195 = vmatprep.subr.bf16.mxu0 %v164
    %196 = vmatpush1.bf16.msra.mxu0 %v163
    %197 = vmatprep.subr.bf16.mxu0 %v166
    %198 = vmatpush1.bf16.msra.mxu0 %v165
    %199 = vmatprep.subr.bf16.mxu0 %v168
    %200 = vmatpush1.bf16.msra.mxu0 %v167
    %201 = vmatprep.subr.bf16.mxu0 %v170
    %202 = vmatpush1.bf16.msra.mxu0 %v169
    %203 = vmatprep.subr.bf16.mxu0 %v172
    %204 = vmatpush1.bf16.msra.mxu0 %v171
    %205 = vmatprep.subr.bf16.mxu0 %v174
    %206 = vmatpush1.bf16.msra.mxu0 %v173
    %207 = vmatprep.subr.bf16.mxu0 %v176
    %208 = vmatpush1.bf16.msra.mxu0 %v175
    %209 = vmatprep.subr.bf16.mxu0 0
    %210 = vmatpush1.bf16.msra.mxu0 0
    %211 = vmatprep.subr.bf16.mxu0 0
    %212 = vmatpush1.bf16.msra.mxu0 0
    %213 = vmatprep.subr.bf16.mxu0 0
    %214 = vmatpush1.bf16.msra.mxu0 0
    %215 = vmatprep.subr.bf16.mxu0 0
    %216 = vmatpush1.bf16.msra.mxu0 0
    %217 = vmatprep.subr.bf16.mxu0 0
    %218 = vmatpush1.bf16.msra.mxu0 0
    %219 = vmatprep.subr.bf16.mxu0 0
    %220 = vmatpush1.bf16.msra.mxu0 0
    %221 = vmatprep.subr.bf16.mxu0 0
    %222 = vmatpush1.bf16.msra.mxu0 0
    %223 = vmatprep.subr.bf16.mxu0 0
    %224 = vmatpush1.bf16.msra.mxu0 0
    %225 = vmatprep.mubr.bf16.mxu0 0
    %226 = vmatmul.mubr.bf16.gmra.mrb[0].mxu0 %v84
    %v227 = vpop.f32.mrb[0].mxu0
    %v228 = vadd.f32 %v106, %v227
    %v229 = vpop.f32.mrb[0].mxu0
    %v230 = vadd.f32 %v110, %v229
    %v231 = vpop.f32.mrb[0].mxu0
    %v232 = vpop.f32.mrb[0].mxu0
    %233 = vdwg.mxu0
    %v234 = vmax.f32 %v228, 0.0
    %v235 = vmax.f32 %v230, 0.0
    %v236 = vpack.c.bf16 %v234, %v234
    %v237 = vpack.c.bf16 %v235, %v235
    %v238 = vld [vmem:[#allocation7] sm:$0xff]
    %v239 = vld [vmem:[#allocation7 + $0x8] sm:$0xff]
    %v240 = vld [vmem:[#allocation7 + $0x10] sm:$0xff]
    %v241 = vld [vmem:[#allocation7 + $0x18] sm:$0xff]
    %v242 = vld [vmem:[#allocation7 + $0x20] sm:$0xff]
    %v243 = vld [vmem:[#allocation7 + $0x28] sm:$0xff]
    %v244 = vld [vmem:[#allocation7 + $0x30] sm:$0xff]
    %v245 = vld [vmem:[#allocation7 + $0x38] sm:$0xff]
    %v246 = vld [vmem:[#allocation7 + $0x40] sm:$0xff]
    %v247 = vld [vmem:[#allocation7 + $0x48] sm:$0xff]
    %v248 = vld [vmem:[#allocation7 + $0x50] sm:$0xff]
    %v249 = vld [vmem:[#allocation7 + $0x58] sm:$0xff]
    %v250 = vld [vmem:[#allocation7 + $0x60] sm:$0xff]
    %v251 = vld [vmem:[#allocation7 + $0x68] sm:$0xff]
    %v252 = vld [vmem:[#allocation7 + $0x70] sm:$0xff]
    %v253 = vld [vmem:[#allocation7 + $0x78] sm:$0xff]
    %v254 = vld [vmem:[#allocation7 + $0x80] sm:$0xff]
    %v255 = vld [vmem:[#allocation7 + $0x88] sm:$0xff]
    %v256 = vld [vmem:[#allocation7 + $0x90] sm:$0xff]
    %v257 = vld [vmem:[#allocation7 + $0x98] sm:$0xff]
    %v258 = vld [vmem:[#allocation7 + $0xa0] sm:$0xff]
    %v259 = vld [vmem:[#allocation7 + $0xa8] sm:$0xff]
    %v260 = vld [vmem:[#allocation7 + $0xb0] sm:$0xff]
    %v261 = vld [vmem:[#allocation7 + $0xb8] sm:$0xff]
    %v262 = vld [vmem:[#allocation7 + $0xc0] sm:$0xff]
    %v263 = vld [vmem:[#allocation7 + $0xc8] sm:$0xff]
    %v264 = vld [vmem:[#allocation7 + $0xd0] sm:$0xff]
    %v265 = vld [vmem:[#allocation7 + $0xd8] sm:$0xff]
    %v266 = vld [vmem:[#allocation7 + $0xe0] sm:$0xff]
    %v267 = vld [vmem:[#allocation7 + $0xe8] sm:$0xff]
    %v268 = vld [vmem:[#allocation7 + $0xf0] sm:$0xff]
    %v269 = vld [vmem:[#allocation7 + $0xf8] sm:$0xff]
    %v270 = vld [vmem:[%s4] sm:$0x3]
    %v272 = vlaneseq
    %v273 = vshrl.u32 %v272, 7
    %v274 = vsub.s32 0, %v273
    %v275 = vrot.slane %v270, %v274
    %v276 = vlaneseq
    %v277 = vshrl.u32 %v276, 7
    %v278 = vsub.s32 1, %v277
    %v279 = vrot.slane %v270, %v278
    %v314 = vunpack.c.l.b16 %v238
    %v315 = vunpack.c.h.b16 %v238
    %v316 = vunpack.c.l.b16 %v239
    %v317 = vunpack.c.h.b16 %v239
    %v318 = vunpack.c.l.b16 %v240
    %v319 = vunpack.c.h.b16 %v240
    %v320 = vunpack.c.l.b16 %v241
    %v321 = vunpack.c.h.b16 %v241
    %v322 = vunpack.c.l.b16 %v242
    %v323 = vunpack.c.h.b16 %v242
    %v324 = vunpack.c.l.b16 %v243
    %v325 = vunpack.c.h.b16 %v243
    %v326 = vunpack.c.l.b16 %v244
    %v327 = vunpack.c.h.b16 %v244
    %v328 = vunpack.c.l.b16 %v245
    %v329 = vunpack.c.h.b16 %v245
    %v330 = vunpack.c.l.b16 %v246
    %v331 = vunpack.c.h.b16 %v246
    %v332 = vunpack.c.l.b16 %v247
    %v333 = vunpack.c.h.b16 %v247
    %v334 = vunpack.c.l.b16 %v248
    %v335 = vunpack.c.h.b16 %v248
    %v336 = vunpack.c.l.b16 %v249
    %v337 = vunpack.c.h.b16 %v249
    %v338 = vunpack.c.l.b16 %v250
    %v339 = vunpack.c.h.b16 %v250
    %v340 = vunpack.c.l.b16 %v251
    %v341 = vunpack.c.h.b16 %v251
    %v342 = vunpack.c.l.b16 %v252
    %v343 = vunpack.c.h.b16 %v252
    %v344 = vunpack.c.l.b16 %v253
    %v345 = vunpack.c.h.b16 %v253
    %v346 = vunpack.c.l.b16 %v254
    %v347 = vunpack.c.h.b16 %v254
    %v348 = vunpack.c.l.b16 %v255
    %v349 = vunpack.c.h.b16 %v255
    %v350 = vunpack.c.l.b16 %v256
    %v351 = vunpack.c.h.b16 %v256
    %v352 = vunpack.c.l.b16 %v257
    %v353 = vunpack.c.h.b16 %v257
    %v354 = vunpack.c.l.b16 %v258
    %v355 = vunpack.c.h.b16 %v258
    %v356 = vunpack.c.l.b16 %v259
    %v357 = vunpack.c.h.b16 %v259
    %v358 = vunpack.c.l.b16 %v260
    %v359 = vunpack.c.h.b16 %v260
    %v360 = vunpack.c.l.b16 %v261
    %v361 = vunpack.c.h.b16 %v261
    %v362 = vunpack.c.l.b16 %v262
    %v363 = vunpack.c.h.b16 %v262
    %v364 = vunpack.c.l.b16 %v263
    %v365 = vunpack.c.h.b16 %v263
    %v366 = vunpack.c.l.b16 %v264
    %v367 = vunpack.c.h.b16 %v264
    %v368 = vunpack.c.l.b16 %v265
    %v369 = vunpack.c.h.b16 %v265
    %v370 = vunpack.c.l.b16 %v266
    %v371 = vunpack.c.h.b16 %v266
    %v372 = vunpack.c.l.b16 %v267
    %v373 = vunpack.c.h.b16 %v267
    %v374 = vunpack.c.l.b16 %v268
    %v375 = vunpack.c.h.b16 %v268
    %v376 = vunpack.c.l.b16 %v269
    %v377 = vunpack.c.h.b16 %v269
    %v378 = vpack.c.b16 %v316, %v314
    %v379 = vpack.c.b16 %v317, %v315
    %v380 = vpack.c.b16 %v320, %v318
    %v381 = vpack.c.b16 %v321, %v319
    %v382 = vpack.c.b16 %v324, %v322
    %v383 = vpack.c.b16 %v325, %v323
    %v384 = vpack.c.b16 %v328, %v326
    %v385 = vpack.c.b16 %v329, %v327
    %v386 = vpack.c.b16 %v332, %v330
    %v387 = vpack.c.b16 %v333, %v331
    %v388 = vpack.c.b16 %v336, %v334
    %v389 = vpack.c.b16 %v337, %v335
    %v390 = vpack.c.b16 %v340, %v338
    %v391 = vpack.c.b16 %v341, %v339
    %v392 = vpack.c.b16 %v344, %v342
    %v393 = vpack.c.b16 %v345, %v343
    %v394 = vpack.c.b16 %v348, %v346
    %v395 = vpack.c.b16 %v349, %v347
    %v396 = vpack.c.b16 %v352, %v350
    %v397 = vpack.c.b16 %v353, %v351
    %v398 = vpack.c.b16 %v356, %v354
    %v399 = vpack.c.b16 %v357, %v355
    %v400 = vpack.c.b16 %v360, %v358
    %v401 = vpack.c.b16 %v361, %v359
    %v402 = vpack.c.b16 %v364, %v362
    %v403 = vpack.c.b16 %v365, %v363
    %v404 = vpack.c.b16 %v368, %v366
    %v405 = vpack.c.b16 %v369, %v367
    %v406 = vpack.c.b16 %v372, %v370
    %v407 = vpack.c.b16 %v373, %v371
    %v408 = vpack.c.b16 %v376, %v374
    %v409 = vpack.c.b16 %v377, %v375
    %442 = vmatprep.subr.bf16.mxu0 %v379
    %443 = vmatpush1.bf16.msra.mxu0 %v378
    %444 = vmatprep.subr.bf16.mxu0 %v381
    %445 = vmatpush1.bf16.msra.mxu0 %v380
    %446 = vmatprep.subr.bf16.mxu0 %v383
    %447 = vmatpush1.bf16.msra.mxu0 %v382
    %448 = vmatprep.subr.bf16.mxu0 %v385
    %449 = vmatpush1.bf16.msra.mxu0 %v384
    %450 = vmatprep.subr.bf16.mxu0 %v387
    %451 = vmatpush1.bf16.msra.mxu0 %v386
    %452 = vmatprep.subr.bf16.mxu0 %v389
    %453 = vmatpush1.bf16.msra.mxu0 %v388
    %454 = vmatprep.subr.bf16.mxu0 %v391
    %455 = vmatpush1.bf16.msra.mxu0 %v390
    %456 = vmatprep.subr.bf16.mxu0 %v393
    %457 = vmatpush1.bf16.msra.mxu0 %v392
    %458 = vmatprep.subr.bf16.mxu0 %v395
    %459 = vmatpush1.bf16.msra.mxu0 %v394
    %460 = vmatprep.subr.bf16.mxu0 %v397
    %461 = vmatpush1.bf16.msra.mxu0 %v396
    %462 = vmatprep.subr.bf16.mxu0 %v399
    %463 = vmatpush1.bf16.msra.mxu0 %v398
    %464 = vmatprep.subr.bf16.mxu0 %v401
    %465 = vmatpush1.bf16.msra.mxu0 %v400
    %466 = vmatprep.subr.bf16.mxu0 %v403
    %467 = vmatpush1.bf16.msra.mxu0 %v402
    %468 = vmatprep.subr.bf16.mxu0 %v405
    %469 = vmatpush1.bf16.msra.mxu0 %v404
    %470 = vmatprep.subr.bf16.mxu0 %v407
    %471 = vmatpush1.bf16.msra.mxu0 %v406
    %472 = vmatprep.subr.bf16.mxu0 %v409
    %473 = vmatpush1.bf16.msra.mxu0 %v408
    %474 = vmatprep.mubr.bf16.mxu0 %v237
    %475 = vmatmul.mubr.bf16.gmra.mrb[0].mxu0 %v236
    %v476 = vpop.f32.mrb[0].mxu0
    %v477 = vadd.f32 %v275, %v476
    %v478 = vpop.f32.mrb[0].mxu0
    %v479 = vadd.f32 %v279, %v478
    %v480 = vpop.f32.mrb[0].mxu0
    %v481 = vpop.f32.mrb[0].mxu0
    %482 = vdwg.mxu0
    %v483 = vmax.f32 %v477, 0.0
    %v484 = vmax.f32 %v479, 0.0
    %v485 = vpack.c.bf16 %v483, %v483
    %v486 = vpack.c.bf16 %v484, %v484
    %v487 = vld [vmem:[#allocation8] sm:$0xff]
    %v488 = vld [vmem:[#allocation8 + $0x8] sm:$0xff]
    %v489 = vld [vmem:[#allocation8 + $0x10] sm:$0xff]
    %v490 = vld [vmem:[#allocation8 + $0x18] sm:$0xff]
    %v491 = vld [vmem:[#allocation8 + $0x20] sm:$0xff]
    %v492 = vld [vmem:[#allocation8 + $0x28] sm:$0xff]
    %v493 = vld [vmem:[#allocation8 + $0x30] sm:$0xff]
    %v494 = vld [vmem:[#allocation8 + $0x38] sm:$0xff]
    %v495 = vld [vmem:[#allocation8 + $0x40] sm:$0xff]
    %v496 = vld [vmem:[#allocation8 + $0x48] sm:$0xff]
    %v497 = vld [vmem:[#allocation8 + $0x50] sm:$0xff]
    %v498 = vld [vmem:[#allocation8 + $0x58] sm:$0xff]
    %v499 = vld [vmem:[#allocation8 + $0x60] sm:$0xff]
    %v500 = vld [vmem:[#allocation8 + $0x68] sm:$0xff]
    %v501 = vld [vmem:[#allocation8 + $0x70] sm:$0xff]
    %v502 = vld [vmem:[#allocation8 + $0x78] sm:$0xff]
    %v503 = vld [vmem:[#allocation8 + $0x80] sm:$0xff]
    %v504 = vld [vmem:[#allocation8 + $0x88] sm:$0xff]
    %v505 = vld [vmem:[#allocation8 + $0x90] sm:$0xff]
    %v506 = vld [vmem:[#allocation8 + $0x98] sm:$0xff]
    %v507 = vld [vmem:[#allocation8 + $0xa0] sm:$0xff]
    %v508 = vld [vmem:[#allocation8 + $0xa8] sm:$0xff]
    %v509 = vld [vmem:[#allocation8 + $0xb0] sm:$0xff]
    %v510 = vld [vmem:[#allocation8 + $0xb8] sm:$0xff]
    %v511 = vld [vmem:[#allocation8 + $0xc0] sm:$0xff]
    %v512 = vld [vmem:[#allocation8 + $0xc8] sm:$0xff]
    %v513 = vld [vmem:[#allocation8 + $0xd0] sm:$0xff]
    %v514 = vld [vmem:[#allocation8 + $0xd8] sm:$0xff]
    %v515 = vld [vmem:[#allocation8 + $0xe0] sm:$0xff]
    %v516 = vld [vmem:[#allocation8 + $0xe8] sm:$0xff]
    %v517 = vld [vmem:[#allocation8 + $0xf0] sm:$0xff]
    %v518 = vld [vmem:[#allocation8 + $0xf8] sm:$0xff]
    %v519 = vld [vmem:[#allocation8 + $0x100] sm:$0xff]
    %v520 = vld [vmem:[#allocation8 + $0x108] sm:$0xff]
    %v521 = vld [vmem:[#allocation8 + $0x110] sm:$0xff]
    %v522 = vld [vmem:[#allocation8 + $0x118] sm:$0xff]
    %v523 = vld [vmem:[#allocation8 + $0x120] sm:$0xff]
    %v524 = vld [vmem:[#allocation8 + $0x128] sm:$0xff]
    %v525 = vld [vmem:[#allocation8 + $0x130] sm:$0xff]
    %v526 = vld [vmem:[#allocation8 + $0x138] sm:$0xff]
    %v527 = vld [vmem:[#allocation8 + $0x140] sm:$0xff]
    %v528 = vld [vmem:[#allocation8 + $0x148] sm:$0xff]
    %v529 = vld [vmem:[#allocation8 + $0x150] sm:$0xff]
    %v530 = vld [vmem:[#allocation8 + $0x158] sm:$0xff]
    %v531 = vld [vmem:[#allocation8 + $0x160] sm:$0xff]
    %v532 = vld [vmem:[#allocation8 + $0x168] sm:$0xff]
    %v533 = vld [vmem:[#allocation8 + $0x170] sm:$0xff]
    %v534 = vld [vmem:[#allocation8 + $0x178] sm:$0xff]
    %v535 = vld [vmem:[#allocation8 + $0x180] sm:$0xff]
    %v536 = vld [vmem:[#allocation8 + $0x188] sm:$0xff]
    %v537 = vld [vmem:[#allocation8 + $0x190] sm:$0xff]
    %v538 = vld [vmem:[#allocation8 + $0x198] sm:$0xff]
    %v539 = vld [vmem:[#allocation8 + $0x1a0] sm:$0xff]
    %v540 = vld [vmem:[#allocation8 + $0x1a8] sm:$0xff]
    %v541 = vld [vmem:[#allocation8 + $0x1b0] sm:$0xff]
    %v542 = vld [vmem:[#allocation8 + $0x1b8] sm:$0xff]
    %v543 = vld [vmem:[#allocation8 + $0x1c0] sm:$0xff]
    %v544 = vld [vmem:[#allocation8 + $0x1c8] sm:$0xff]
    %v545 = vld [vmem:[#allocation8 + $0x1d0] sm:$0xff]
    %v546 = vld [vmem:[#allocation8 + $0x1d8] sm:$0xff]
    %v547 = vld [vmem:[#allocation8 + $0x1e0] sm:$0xff]
    %v548 = vld [vmem:[#allocation8 + $0x1e8] sm:$0xff]
    %v549 = vld [vmem:[#allocation8 + $0x1f0] sm:$0xff]
    %v550 = vld [vmem:[#allocation8 + $0x1f8] sm:$0xff]
    %v551 = vld [vmem:[#allocation8 + $0x200] sm:$0xff]
    %v552 = vld [vmem:[#allocation8 + $0x208] sm:$0xff]
    %v553 = vld [vmem:[#allocation8 + $0x210] sm:$0xff]
    %v554 = vld [vmem:[#allocation8 + $0x218] sm:$0xff]
    %v555 = vld [vmem:[#allocation8 + $0x220] sm:$0xff]
    %v556 = vld [vmem:[#allocation8 + $0x228] sm:$0xff]
    %v557 = vld [vmem:[#allocation8 + $0x230] sm:$0xff]
    %v558 = vld [vmem:[#allocation8 + $0x238] sm:$0xff]
    %v559 = vld [vmem:[#allocation8 + $0x240] sm:$0xff]
    %v560 = vld [vmem:[#allocation8 + $0x248] sm:$0xff]
    %v561 = vld [vmem:[#allocation8 + $0x250] sm:$0xff]
    %v562 = vld [vmem:[#allocation8 + $0x258] sm:$0xff]
    %v563 = vld [vmem:[#allocation8 + $0x260] sm:$0xff]
    %v564 = vld [vmem:[#allocation8 + $0x268] sm:$0xff]
    %v565 = vld [vmem:[#allocation8 + $0x270] sm:$0xff]
    %v566 = vld [vmem:[#allocation8 + $0x278] sm:$0xff]
    %v567 = vld [vmem:[#allocation8 + $0x280] sm:$0xff]
    %v568 = vld [vmem:[#allocation8 + $0x288] sm:$0xff]
    %v569 = vld [vmem:[#allocation8 + $0x290] sm:$0xff]
    %v570 = vld [vmem:[#allocation8 + $0x298] sm:$0xff]
    %v571 = vld [vmem:[#allocation8 + $0x2a0] sm:$0xff]
    %v572 = vld [vmem:[#allocation8 + $0x2a8] sm:$0xff]
    %v573 = vld [vmem:[#allocation8 + $0x2b0] sm:$0xff]
    %v574 = vld [vmem:[#allocation8 + $0x2b8] sm:$0xff]
    %v575 = vld [vmem:[#allocation8 + $0x2c0] sm:$0xff]
    %v576 = vld [vmem:[#allocation8 + $0x2c8] sm:$0xff]
    %v577 = vld [vmem:[#allocation8 + $0x2d0] sm:$0xff]
    %v578 = vld [vmem:[#allocation8 + $0x2d8] sm:$0xff]
    %v579 = vld [vmem:[#allocation8 + $0x2e0] sm:$0xff]
    %v580 = vld [vmem:[#allocation8 + $0x2e8] sm:$0xff]
    %v581 = vld [vmem:[#allocation8 + $0x2f0] sm:$0xff]
    %v582 = vld [vmem:[#allocation8 + $0x2f8] sm:$0xff]
    %v583 = vld [vmem:[#allocation8 + $0x300] sm:$0xff]
    %v584 = vld [vmem:[#allocation8 + $0x308] sm:$0xff]
    %v585 = vld [vmem:[#allocation8 + $0x310] sm:$0xff]
    %v586 = vld [vmem:[#allocation8 + $0x318] sm:$0xff]
    %v587 = vld [vmem:[#allocation8 + $0x320] sm:$0xff]
    %v588 = vld [vmem:[#allocation8 + $0x328] sm:$0xff]
    %v589 = vld [vmem:[#allocation8 + $0x330] sm:$0xff]
    %v590 = vld [vmem:[#allocation8 + $0x338] sm:$0xff]
    %v591 = vld [vmem:[#allocation8 + $0x340] sm:$0xff]
    %v592 = vld [vmem:[#allocation8 + $0x348] sm:$0xff]
    %v593 = vld [vmem:[#allocation8 + $0x350] sm:$0xff]
    %v594 = vld [vmem:[#allocation8 + $0x358] sm:$0xff]
    %v595 = vld [vmem:[#allocation8 + $0x360] sm:$0xff]
    %v596 = vld [vmem:[#allocation8 + $0x368] sm:$0xff]
    %v597 = vld [vmem:[#allocation8 + $0x370] sm:$0xff]
    %v598 = vld [vmem:[#allocation8 + $0x378] sm:$0xff]
    %v599 = vld [vmem:[#allocation8 + $0x380] sm:$0xff]
    %v600 = vld [vmem:[#allocation8 + $0x388] sm:$0xff]
    %v601 = vld [vmem:[#allocation8 + $0x390] sm:$0xff]
    %v602 = vld [vmem:[#allocation8 + $0x398] sm:$0xff]
    %v603 = vld [vmem:[#allocation8 + $0x3a0] sm:$0xff]
    %v604 = vld [vmem:[#allocation8 + $0x3a8] sm:$0xff]
    %v605 = vld [vmem:[#allocation8 + $0x3b0] sm:$0xff]
    %v606 = vld [vmem:[#allocation8 + $0x3b8] sm:$0xff]
    %v607 = vld [vmem:[#allocation8 + $0x3c0] sm:$0xff]
    %v608 = vld [vmem:[#allocation8 + $0x3c8] sm:$0xff]
    %v609 = vld [vmem:[#allocation8 + $0x3d0] sm:$0xff]
    %v610 = vld [vmem:[#allocation8 + $0x3d8] sm:$0xff]
    %v611 = vld [vmem:[#allocation8 + $0x3e0] sm:$0xff]
    %v612 = vld [vmem:[#allocation8 + $0x3e8] sm:$0xff]
    %v613 = vld [vmem:[#allocation8 + $0x3f0] sm:$0xff]
    %v614 = vld [vmem:[#allocation8 + $0x3f8] sm:$0xff]
    %v615 = vld [vmem:[#allocation8 + $0x400] sm:$0xff]
    %v616 = vld [vmem:[#allocation8 + $0x408] sm:$0xff]
    %v617 = vld [vmem:[#allocation8 + $0x410] sm:$0xff]
    %v618 = vld [vmem:[#allocation8 + $0x418] sm:$0xff]
    %v619 = vld [vmem:[#allocation8 + $0x420] sm:$0xff]
    %v620 = vld [vmem:[#allocation8 + $0x428] sm:$0xff]
    %v621 = vld [vmem:[#allocation8 + $0x430] sm:$0xff]
    %v622 = vld [vmem:[#allocation8 + $0x438] sm:$0xff]
    %v623 = vld [vmem:[#allocation8 + $0x440] sm:$0xff]
    %v624 = vld [vmem:[#allocation8 + $0x448] sm:$0xff]
    %v625 = vld [vmem:[#allocation8 + $0x450] sm:$0xff]
    %v626 = vld [vmem:[#allocation8 + $0x458] sm:$0xff]
    %v627 = vld [vmem:[#allocation8 + $0x460] sm:$0xff]
    %v628 = vld [vmem:[#allocation8 + $0x468] sm:$0xff]
    %v629 = vld [vmem:[#allocation8 + $0x470] sm:$0xff]
    %v630 = vld [vmem:[#allocation8 + $0x478] sm:$0xff]
    %v631 = vld [vmem:[#allocation8 + $0x480] sm:$0xff]
    %v632 = vld [vmem:[#allocation8 + $0x488] sm:$0xff]
    %v633 = vld [vmem:[#allocation8 + $0x490] sm:$0xff]
    %v634 = vld [vmem:[#allocation8 + $0x498] sm:$0xff]
    %v635 = vld [vmem:[#allocation8 + $0x4a0] sm:$0xff]
    %v636 = vld [vmem:[#allocation8 + $0x4a8] sm:$0xff]
    %v637 = vld [vmem:[#allocation8 + $0x4b0] sm:$0xff]
    %v638 = vld [vmem:[#allocation8 + $0x4b8] sm:$0xff]
    %v639 = vld [vmem:[#allocation8 + $0x4c0] sm:$0xff]
    %v640 = vld [vmem:[#allocation8 + $0x4c8] sm:$0xff]
    %v641 = vld [vmem:[#allocation8 + $0x4d0] sm:$0xff]
    %v642 = vld [vmem:[#allocation8 + $0x4d8] sm:$0xff]
    %v643 = vld [vmem:[#allocation8 + $0x4e0] sm:$0xff]
    %v644 = vld [vmem:[#allocation8 + $0x4e8] sm:$0xff]
    %v645 = vld [vmem:[#allocation8 + $0x4f0] sm:$0xff]
    %v646 = vld [vmem:[#allocation8 + $0x4f8] sm:$0xff]
    %v647 = vld [vmem:[#allocation8 + $0x500] sm:$0xff]
    %v648 = vld [vmem:[#allocation8 + $0x508] sm:$0xff]
    %v649 = vld [vmem:[#allocation8 + $0x510] sm:$0xff]
    %v650 = vld [vmem:[#allocation8 + $0x518] sm:$0xff]
    %v651 = vld [vmem:[#allocation8 + $0x520] sm:$0xff]
    %v652 = vld [vmem:[#allocation8 + $0x528] sm:$0xff]
    %v653 = vld [vmem:[#allocation8 + $0x530] sm:$0xff]
    %v654 = vld [vmem:[#allocation8 + $0x538] sm:$0xff]
    %v655 = vld [vmem:[#allocation8 + $0x540] sm:$0xff]
    %v656 = vld [vmem:[#allocation8 + $0x548] sm:$0xff]
    %v657 = vld [vmem:[#allocation8 + $0x550] sm:$0xff]
    %v658 = vld [vmem:[#allocation8 + $0x558] sm:$0xff]
    %v659 = vld [vmem:[#allocation8 + $0x560] sm:$0xff]
    %v660 = vld [vmem:[#allocation8 + $0x568] sm:$0xff]
    %v661 = vld [vmem:[#allocation8 + $0x570] sm:$0xff]
    %v662 = vld [vmem:[#allocation8 + $0x578] sm:$0xff]
    %v663 = vld [vmem:[#allocation8 + $0x580] sm:$0xff]
    %v664 = vld [vmem:[#allocation8 + $0x588] sm:$0xff]
    %v665 = vld [vmem:[#allocation8 + $0x590] sm:$0xff]
    %v666 = vld [vmem:[#allocation8 + $0x598] sm:$0xff]
    %v667 = vld [vmem:[#allocation8 + $0x5a0] sm:$0xff]
    %v668 = vld [vmem:[#allocation8 + $0x5a8] sm:$0xff]
    %v669 = vld [vmem:[#allocation8 + $0x5b0] sm:$0xff]
    %v670 = vld [vmem:[#allocation8 + $0x5b8] sm:$0xff]
    %v671 = vld [vmem:[#allocation8 + $0x5c0] sm:$0xff]
    %v672 = vld [vmem:[#allocation8 + $0x5c8] sm:$0xff]
    %v673 = vld [vmem:[#allocation8 + $0x5d0] sm:$0xff]
    %v674 = vld [vmem:[#allocation8 + $0x5d8] sm:$0xff]
    %v675 = vld [vmem:[#allocation8 + $0x5e0] sm:$0xff]
    %v676 = vld [vmem:[#allocation8 + $0x5e8] sm:$0xff]
    %v677 = vld [vmem:[#allocation8 + $0x5f0] sm:$0xff]
    %v678 = vld [vmem:[#allocation8 + $0x5f8] sm:$0xff]
    %v679 = vld [vmem:[#allocation8 + $0x600] sm:$0xff]
    %v680 = vld [vmem:[#allocation8 + $0x608] sm:$0xff]
    %v681 = vld [vmem:[#allocation8 + $0x610] sm:$0xff]
    %v682 = vld [vmem:[#allocation8 + $0x618] sm:$0xff]
    %v683 = vld [vmem:[#allocation8 + $0x620] sm:$0xff]
    %v684 = vld [vmem:[#allocation8 + $0x628] sm:$0xff]
    %v685 = vld [vmem:[#allocation8 + $0x630] sm:$0xff]
    %v686 = vld [vmem:[#allocation8 + $0x638] sm:$0xff]
    %v687 = vld [vmem:[#allocation8 + $0x640] sm:$0xff]
    %v688 = vld [vmem:[#allocation8 + $0x648] sm:$0xff]
    %v689 = vld [vmem:[#allocation8 + $0x650] sm:$0xff]
    %v690 = vld [vmem:[#allocation8 + $0x658] sm:$0xff]
    %v691 = vld [vmem:[#allocation8 + $0x660] sm:$0xff]
    %v692 = vld [vmem:[#allocation8 + $0x668] sm:$0xff]
    %v693 = vld [vmem:[#allocation8 + $0x670] sm:$0xff]
    %v694 = vld [vmem:[#allocation8 + $0x678] sm:$0xff]
    %v695 = vld [vmem:[#allocation8 + $0x680] sm:$0xff]
    %v696 = vld [vmem:[#allocation8 + $0x688] sm:$0xff]
    %v697 = vld [vmem:[#allocation8 + $0x690] sm:$0xff]
    %v698 = vld [vmem:[#allocation8 + $0x698] sm:$0xff]
    %v699 = vld [vmem:[#allocation8 + $0x6a0] sm:$0xff]
    %v700 = vld [vmem:[#allocation8 + $0x6a8] sm:$0xff]
    %v701 = vld [vmem:[#allocation8 + $0x6b0] sm:$0xff]
    %v702 = vld [vmem:[#allocation8 + $0x6b8] sm:$0xff]
    %v703 = vld [vmem:[#allocation8 + $0x6c0] sm:$0xff]
    %v704 = vld [vmem:[#allocation8 + $0x6c8] sm:$0xff]
    %v705 = vld [vmem:[#allocation8 + $0x6d0] sm:$0xff]
    %v706 = vld [vmem:[#allocation8 + $0x6d8] sm:$0xff]
    %v707 = vld [vmem:[#allocation8 + $0x6e0] sm:$0xff]
    %v708 = vld [vmem:[#allocation8 + $0x6e8] sm:$0xff]
    %v709 = vld [vmem:[#allocation8 + $0x6f0] sm:$0xff]
    %v710 = vld [vmem:[#allocation8 + $0x6f8] sm:$0xff]
    %v711 = vld [vmem:[#allocation8 + $0x700] sm:$0xff]
    %v712 = vld [vmem:[#allocation8 + $0x708] sm:$0xff]
    %v713 = vld [vmem:[#allocation8 + $0x710] sm:$0xff]
    %v714 = vld [vmem:[#allocation8 + $0x718] sm:$0xff]
    %v715 = vld [vmem:[#allocation8 + $0x720] sm:$0xff]
    %v716 = vld [vmem:[#allocation8 + $0x728] sm:$0xff]
    %v717 = vld [vmem:[#allocation8 + $0x730] sm:$0xff]
    %v718 = vld [vmem:[#allocation8 + $0x738] sm:$0xff]
    %v719 = vld [vmem:[#allocation8 + $0x740] sm:$0xff]
    %v720 = vld [vmem:[#allocation8 + $0x748] sm:$0xff]
    %v721 = vld [vmem:[#allocation8 + $0x750] sm:$0xff]
    %v722 = vld [vmem:[#allocation8 + $0x758] sm:$0xff]
    %v723 = vld [vmem:[#allocation8 + $0x760] sm:$0xff]
    %v724 = vld [vmem:[#allocation8 + $0x768] sm:$0xff]
    %v725 = vld [vmem:[#allocation8 + $0x770] sm:$0xff]
    %v726 = vld [vmem:[#allocation8 + $0x778] sm:$0xff]
    %v727 = vld [vmem:[#allocation8 + $0x780] sm:$0xff]
    %v728 = vld [vmem:[#allocation8 + $0x788] sm:$0xff]
    %v729 = vld [vmem:[#allocation8 + $0x790] sm:$0xff]
    %v730 = vld [vmem:[#allocation8 + $0x798] sm:$0xff]
    %v731 = vld [vmem:[#allocation8 + $0x7a0] sm:$0xff]
    %v732 = vld [vmem:[#allocation8 + $0x7a8] sm:$0xff]
    %v733 = vld [vmem:[#allocation8 + $0x7b0] sm:$0xff]
    %v734 = vld [vmem:[#allocation8 + $0x7b8] sm:$0xff]
    %v735 = vld [vmem:[#allocation8 + $0x7c0] sm:$0xff]
    %v736 = vld [vmem:[#allocation8 + $0x7c8] sm:$0xff]
    %v737 = vld [vmem:[#allocation8 + $0x7d0] sm:$0xff]
    %v738 = vld [vmem:[#allocation8 + $0x7d8] sm:$0xff]
    %v739 = vld [vmem:[#allocation8 + $0x7e0] sm:$0xff]
    %v740 = vld [vmem:[#allocation8 + $0x7e8] sm:$0xff]
    %v741 = vld [vmem:[#allocation8 + $0x7f0] sm:$0xff]
    %v742 = vld [vmem:[#allocation8 + $0x7f8] sm:$0xff]
    %v743 = vld [vmem:[%s6] sm:$0xff]
    %v744 = vld [vmem:[%s6 + $0x8] sm:$0xff]
    %v747 = vlaneseq
    %v748 = vshrl.u32 %v747, 7
    %v749 = vsub.s32 0, %v748
    %v750 = vrot.slane %v743, %v749
    %v751 = vlaneseq
    %v752 = vshrl.u32 %v751, 7
    %v753 = vsub.s32 1, %v752
    %v754 = vrot.slane %v743, %v753
    %v755 = vlaneseq
    %v756 = vshrl.u32 %v755, 7
    %v757 = vsub.s32 2, %v756
    %v758 = vrot.slane %v743, %v757
    %v759 = vlaneseq
    %v760 = vshrl.u32 %v759, 7
    %v761 = vsub.s32 3, %v760
    %v762 = vrot.slane %v743, %v761
    %v763 = vlaneseq
    %v764 = vshrl.u32 %v763, 7
    %v765 = vsub.s32 4, %v764
    %v766 = vrot.slane %v743, %v765
    %v767 = vlaneseq
    %v768 = vshrl.u32 %v767, 7
    %v769 = vsub.s32 5, %v768
    %v770 = vrot.slane %v743, %v769
    %v771 = vlaneseq
    %v772 = vshrl.u32 %v771, 7
    %v773 = vsub.s32 6, %v772
    %v774 = vrot.slane %v743, %v773
    %v775 = vlaneseq
    %v776 = vshrl.u32 %v775, 7
    %v777 = vsub.s32 7, %v776
    %v778 = vrot.slane %v743, %v777
    %v779 = vlaneseq
    %v780 = vshrl.u32 %v779, 7
    %v781 = vsub.s32 0, %v780
    %v782 = vrot.slane %v744, %v781
    %v783 = vlaneseq
    %v784 = vshrl.u32 %v783, 7
    %v785 = vsub.s32 1, %v784
    %v786 = vrot.slane %v744, %v785
    %v787 = vlaneseq
    %v788 = vshrl.u32 %v787, 7
    %v789 = vsub.s32 2, %v788
    %v790 = vrot.slane %v744, %v789
    %v791 = vlaneseq
    %v792 = vshrl.u32 %v791, 7
    %v793 = vsub.s32 3, %v792
    %v794 = vrot.slane %v744, %v793
    %v795 = vlaneseq
    %v796 = vshrl.u32 %v795, 7
    %v797 = vsub.s32 4, %v796
    %v798 = vrot.slane %v744, %v797
    %v799 = vlaneseq
    %v800 = vshrl.u32 %v799, 7
    %v801 = vsub.s32 5, %v800
    %v802 = vrot.slane %v744, %v801
    %v803 = vlaneseq
    %v804 = vshrl.u32 %v803, 7
    %v805 = vsub.s32 6, %v804
    %v806 = vrot.slane %v744, %v805
    %v807 = vlaneseq
    %v808 = vshrl.u32 %v807, 7
    %v809 = vsub.s32 7, %v808
    %v810 = vrot.slane %v744, %v809
    %v1083 = vunpack.c.l.b16 %v487
    %v1084 = vunpack.c.h.b16 %v487
    %v1085 = vunpack.c.l.b16 %v488
    %v1086 = vunpack.c.h.b16 %v488
    %v1087 = vunpack.c.l.b16 %v489
    %v1088 = vunpack.c.h.b16 %v489
    %v1089 = vunpack.c.l.b16 %v490
    %v1090 = vunpack.c.h.b16 %v490
    %v1091 = vunpack.c.l.b16 %v491
    %v1092 = vunpack.c.h.b16 %v491
    %v1093 = vunpack.c.l.b16 %v492
    %v1094 = vunpack.c.h.b16 %v492
    %v1095 = vunpack.c.l.b16 %v493
    %v1096 = vunpack.c.h.b16 %v493
    %v1097 = vunpack.c.l.b16 %v494
    %v1098 = vunpack.c.h.b16 %v494
    %v1099 = vunpack.c.l.b16 %v495
    %v1100 = vunpack.c.h.b16 %v495
    %v1101 = vunpack.c.l.b16 %v496
    %v1102 = vunpack.c.h.b16 %v496
    %v1103 = vunpack.c.l.b16 %v497
    %v1104 = vunpack.c.h.b16 %v497
    %v1105 = vunpack.c.l.b16 %v498
    %v1106 = vunpack.c.h.b16 %v498
    %v1107 = vunpack.c.l.b16 %v499
    %v1108 = vunpack.c.h.b16 %v499
    %v1109 = vunpack.c.l.b16 %v500
    %v1110 = vunpack.c.h.b16 %v500
    %v1111 = vunpack.c.l.b16 %v501
    %v1112 = vunpack.c.h.b16 %v501
    %v1113 = vunpack.c.l.b16 %v502
    %v1114 = vunpack.c.h.b16 %v502
    %v1115 = vunpack.c.l.b16 %v503
    %v1116 = vunpack.c.h.b16 %v503
    %v1117 = vunpack.c.l.b16 %v504
    %v1118 = vunpack.c.h.b16 %v504
    %v1119 = vunpack.c.l.b16 %v505
    %v1120 = vunpack.c.h.b16 %v505
    %v1121 = vunpack.c.l.b16 %v506
    %v1122 = vunpack.c.h.b16 %v506
    %v1123 = vunpack.c.l.b16 %v507
    %v1124 = vunpack.c.h.b16 %v507
    %v1125 = vunpack.c.l.b16 %v508
    %v1126 = vunpack.c.h.b16 %v508
    %v1127 = vunpack.c.l.b16 %v509
    %v1128 = vunpack.c.h.b16 %v509
    %v1129 = vunpack.c.l.b16 %v510
    %v1130 = vunpack.c.h.b16 %v510
    %v1131 = vunpack.c.l.b16 %v511
    %v1132 = vunpack.c.h.b16 %v511
    %v1133 = vunpack.c.l.b16 %v512
    %v1134 = vunpack.c.h.b16 %v512
    %v1135 = vunpack.c.l.b16 %v513
    %v1136 = vunpack.c.h.b16 %v513
    %v1137 = vunpack.c.l.b16 %v514
    %v1138 = vunpack.c.h.b16 %v514
    %v1139 = vunpack.c.l.b16 %v515
    %v1140 = vunpack.c.h.b16 %v515
    %v1141 = vunpack.c.l.b16 %v516
    %v1142 = vunpack.c.h.b16 %v516
    %v1143 = vunpack.c.l.b16 %v517
    %v1144 = vunpack.c.h.b16 %v517
    %v1145 = vunpack.c.l.b16 %v518
    %v1146 = vunpack.c.h.b16 %v518
    %v1147 = vunpack.c.l.b16 %v519
    %v1148 = vunpack.c.h.b16 %v519
    %v1149 = vunpack.c.l.b16 %v520
    %v1150 = vunpack.c.h.b16 %v520
    %v1151 = vunpack.c.l.b16 %v521
    %v1152 = vunpack.c.h.b16 %v521
    %v1153 = vunpack.c.l.b16 %v522
    %v1154 = vunpack.c.h.b16 %v522
    %v1155 = vunpack.c.l.b16 %v523
    %v1156 = vunpack.c.h.b16 %v523
    %v1157 = vunpack.c.l.b16 %v524
    %v1158 = vunpack.c.h.b16 %v524
    %v1159 = vunpack.c.l.b16 %v525
    %v1160 = vunpack.c.h.b16 %v525
    %v1161 = vunpack.c.l.b16 %v526
    %v1162 = vunpack.c.h.b16 %v526
    %v1163 = vunpack.c.l.b16 %v527
    %v1164 = vunpack.c.h.b16 %v527
    %v1165 = vunpack.c.l.b16 %v528
    %v1166 = vunpack.c.h.b16 %v528
    %v1167 = vunpack.c.l.b16 %v529
    %v1168 = vunpack.c.h.b16 %v529
    %v1169 = vunpack.c.l.b16 %v530
    %v1170 = vunpack.c.h.b16 %v530
    %v1171 = vunpack.c.l.b16 %v531
    %v1172 = vunpack.c.h.b16 %v531
    %v1173 = vunpack.c.l.b16 %v532
    %v1174 = vunpack.c.h.b16 %v532
    %v1175 = vunpack.c.l.b16 %v533
    %v1176 = vunpack.c.h.b16 %v533
    %v1177 = vunpack.c.l.b16 %v534
    %v1178 = vunpack.c.h.b16 %v534
    %v1179 = vunpack.c.l.b16 %v535
    %v1180 = vunpack.c.h.b16 %v535
    %v1181 = vunpack.c.l.b16 %v536
    %v1182 = vunpack.c.h.b16 %v536
    %v1183 = vunpack.c.l.b16 %v537
    %v1184 = vunpack.c.h.b16 %v537
    %v1185 = vunpack.c.l.b16 %v538
    %v1186 = vunpack.c.h.b16 %v538
    %v1187 = vunpack.c.l.b16 %v539
    %v1188 = vunpack.c.h.b16 %v539
    %v1189 = vunpack.c.l.b16 %v540
    %v1190 = vunpack.c.h.b16 %v540
    %v1191 = vunpack.c.l.b16 %v541
    %v1192 = vunpack.c.h.b16 %v541
    %v1193 = vunpack.c.l.b16 %v542
    %v1194 = vunpack.c.h.b16 %v542
    %v1195 = vunpack.c.l.b16 %v543
    %v1196 = vunpack.c.h.b16 %v543
    %v1197 = vunpack.c.l.b16 %v544
    %v1198 = vunpack.c.h.b16 %v544
    %v1199 = vunpack.c.l.b16 %v545
    %v1200 = vunpack.c.h.b16 %v545
    %v1201 = vunpack.c.l.b16 %v546
    %v1202 = vunpack.c.h.b16 %v546
    %v1203 = vunpack.c.l.b16 %v547
    %v1204 = vunpack.c.h.b16 %v547
    %v1205 = vunpack.c.l.b16 %v548
    %v1206 = vunpack.c.h.b16 %v548
    %v1207 = vunpack.c.l.b16 %v549
    %v1208 = vunpack.c.h.b16 %v549
    %v1209 = vunpack.c.l.b16 %v550
    %v1210 = vunpack.c.h.b16 %v550
    %v1211 = vunpack.c.l.b16 %v551
    %v1212 = vunpack.c.h.b16 %v551
    %v1213 = vunpack.c.l.b16 %v552
    %v1214 = vunpack.c.h.b16 %v552
    %v1215 = vunpack.c.l.b16 %v553
    %v1216 = vunpack.c.h.b16 %v553
    %v1217 = vunpack.c.l.b16 %v554
    %v1218 = vunpack.c.h.b16 %v554
    %v1219 = vunpack.c.l.b16 %v555
    %v1220 = vunpack.c.h.b16 %v555
    %v1221 = vunpack.c.l.b16 %v556
    %v1222 = vunpack.c.h.b16 %v556
    %v1223 = vunpack.c.l.b16 %v557
    %v1224 = vunpack.c.h.b16 %v557
    %v1225 = vunpack.c.l.b16 %v558
    %v1226 = vunpack.c.h.b16 %v558
    %v1227 = vunpack.c.l.b16 %v559
    %v1228 = vunpack.c.h.b16 %v559
    %v1229 = vunpack.c.l.b16 %v560
    %v1230 = vunpack.c.h.b16 %v560
    %v1231 = vunpack.c.l.b16 %v561
    %v1232 = vunpack.c.h.b16 %v561
    %v1233 = vunpack.c.l.b16 %v562
    %v1234 = vunpack.c.h.b16 %v562
    %v1235 = vunpack.c.l.b16 %v563
    %v1236 = vunpack.c.h.b16 %v563
    %v1237 = vunpack.c.l.b16 %v564
    %v1238 = vunpack.c.h.b16 %v564
    %v1239 = vunpack.c.l.b16 %v565
    %v1240 = vunpack.c.h.b16 %v565
    %v1241 = vunpack.c.l.b16 %v566
    %v1242 = vunpack.c.h.b16 %v566
    %v1243 = vunpack.c.l.b16 %v567
    %v1244 = vunpack.c.h.b16 %v567
    %v1245 = vunpack.c.l.b16 %v568
    %v1246 = vunpack.c.h.b16 %v568
    %v1247 = vunpack.c.l.b16 %v569
    %v1248 = vunpack.c.h.b16 %v569
    %v1249 = vunpack.c.l.b16 %v570
    %v1250 = vunpack.c.h.b16 %v570
    %v1251 = vunpack.c.l.b16 %v571
    %v1252 = vunpack.c.h.b16 %v571
    %v1253 = vunpack.c.l.b16 %v572
    %v1254 = vunpack.c.h.b16 %v572
    %v1255 = vunpack.c.l.b16 %v573
    %v1256 = vunpack.c.h.b16 %v573
    %v1257 = vunpack.c.l.b16 %v574
    %v1258 = vunpack.c.h.b16 %v574
    %v1259 = vunpack.c.l.b16 %v575
    %v1260 = vunpack.c.h.b16 %v575
    %v1261 = vunpack.c.l.b16 %v576
    %v1262 = vunpack.c.h.b16 %v576
    %v1263 = vunpack.c.l.b16 %v577
    %v1264 = vunpack.c.h.b16 %v577
    %v1265 = vunpack.c.l.b16 %v578
    %v1266 = vunpack.c.h.b16 %v578
    %v1267 = vunpack.c.l.b16 %v579
    %v1268 = vunpack.c.h.b16 %v579
    %v1269 = vunpack.c.l.b16 %v580
    %v1270 = vunpack.c.h.b16 %v580
    %v1271 = vunpack.c.l.b16 %v581
    %v1272 = vunpack.c.h.b16 %v581
    %v1273 = vunpack.c.l.b16 %v582
    %v1274 = vunpack.c.h.b16 %v582
    %v1275 = vunpack.c.l.b16 %v583
    %v1276 = vunpack.c.h.b16 %v583
    %v1277 = vunpack.c.l.b16 %v584
    %v1278 = vunpack.c.h.b16 %v584
    %v1279 = vunpack.c.l.b16 %v585
    %v1280 = vunpack.c.h.b16 %v585
    %v1281 = vunpack.c.l.b16 %v586
    %v1282 = vunpack.c.h.b16 %v586
    %v1283 = vunpack.c.l.b16 %v587
    %v1284 = vunpack.c.h.b16 %v587
    %v1285 = vunpack.c.l.b16 %v588
    %v1286 = vunpack.c.h.b16 %v588
    %v1287 = vunpack.c.l.b16 %v589
    %v1288 = vunpack.c.h.b16 %v589
    %v1289 = vunpack.c.l.b16 %v590
    %v1290 = vunpack.c.h.b16 %v590
    %v1291 = vunpack.c.l.b16 %v591
    %v1292 = vunpack.c.h.b16 %v591
    %v1293 = vunpack.c.l.b16 %v592
    %v1294 = vunpack.c.h.b16 %v592
    %v1295 = vunpack.c.l.b16 %v593
    %v1296 = vunpack.c.h.b16 %v593
    %v1297 = vunpack.c.l.b16 %v594
    %v1298 = vunpack.c.h.b16 %v594
    %v1299 = vunpack.c.l.b16 %v595
    %v1300 = vunpack.c.h.b16 %v595
    %v1301 = vunpack.c.l.b16 %v596
    %v1302 = vunpack.c.h.b16 %v596
    %v1303 = vunpack.c.l.b16 %v597
    %v1304 = vunpack.c.h.b16 %v597
    %v1305 = vunpack.c.l.b16 %v598
    %v1306 = vunpack.c.h.b16 %v598
    %v1307 = vunpack.c.l.b16 %v599
    %v1308 = vunpack.c.h.b16 %v599
    %v1309 = vunpack.c.l.b16 %v600
    %v1310 = vunpack.c.h.b16 %v600
    %v1311 = vunpack.c.l.b16 %v601
    %v1312 = vunpack.c.h.b16 %v601
    %v1313 = vunpack.c.l.b16 %v602
    %v1314 = vunpack.c.h.b16 %v602
    %v1315 = vunpack.c.l.b16 %v603
    %v1316 = vunpack.c.h.b16 %v603
    %v1317 = vunpack.c.l.b16 %v604
    %v1318 = vunpack.c.h.b16 %v604
    %v1319 = vunpack.c.l.b16 %v605
    %v1320 = vunpack.c.h.b16 %v605
    %v1321 = vunpack.c.l.b16 %v606
    %v1322 = vunpack.c.h.b16 %v606
    %v1323 = vunpack.c.l.b16 %v607
    %v1324 = vunpack.c.h.b16 %v607
    %v1325 = vunpack.c.l.b16 %v608
    %v1326 = vunpack.c.h.b16 %v608
    %v1327 = vunpack.c.l.b16 %v609
    %v1328 = vunpack.c.h.b16 %v609
    %v1329 = vunpack.c.l.b16 %v610
    %v1330 = vunpack.c.h.b16 %v610
    %v1331 = vunpack.c.l.b16 %v611
    %v1332 = vunpack.c.h.b16 %v611
    %v1333 = vunpack.c.l.b16 %v612
    %v1334 = vunpack.c.h.b16 %v612
    %v1335 = vunpack.c.l.b16 %v613
    %v1336 = vunpack.c.h.b16 %v613
    %v1337 = vunpack.c.l.b16 %v614
    %v1338 = vunpack.c.h.b16 %v614
    %v1339 = vunpack.c.l.b16 %v615
    %v1340 = vunpack.c.h.b16 %v615
    %v1341 = vunpack.c.l.b16 %v616
    %v1342 = vunpack.c.h.b16 %v616
    %v1343 = vunpack.c.l.b16 %v617
    %v1344 = vunpack.c.h.b16 %v617
    %v1345 = vunpack.c.l.b16 %v618
    %v1346 = vunpack.c.h.b16 %v618
    %v1347 = vunpack.c.l.b16 %v619
    %v1348 = vunpack.c.h.b16 %v619
    %v1349 = vunpack.c.l.b16 %v620
    %v1350 = vunpack.c.h.b16 %v620
    %v1351 = vunpack.c.l.b16 %v621
    %v1352 = vunpack.c.h.b16 %v621
    %v1353 = vunpack.c.l.b16 %v622
    %v1354 = vunpack.c.h.b16 %v622
    %v1355 = vunpack.c.l.b16 %v623
    %v1356 = vunpack.c.h.b16 %v623
    %v1357 = vunpack.c.l.b16 %v624
    %v1358 = vunpack.c.h.b16 %v624
    %v1359 = vunpack.c.l.b16 %v625
    %v1360 = vunpack.c.h.b16 %v625
    %v1361 = vunpack.c.l.b16 %v626
    %v1362 = vunpack.c.h.b16 %v626
    %v1363 = vunpack.c.l.b16 %v627
    %v1364 = vunpack.c.h.b16 %v627
    %v1365 = vunpack.c.l.b16 %v628
    %v1366 = vunpack.c.h.b16 %v628
    %v1367 = vunpack.c.l.b16 %v629
    %v1368 = vunpack.c.h.b16 %v629
    %v1369 = vunpack.c.l.b16 %v630
    %v1370 = vunpack.c.h.b16 %v630
    %v1371 = vunpack.c.l.b16 %v631
    %v1372 = vunpack.c.h.b16 %v631
    %v1373 = vunpack.c.l.b16 %v632
    %v1374 = vunpack.c.h.b16 %v632
    %v1375 = vunpack.c.l.b16 %v633
    %v1376 = vunpack.c.h.b16 %v633
    %v1377 = vunpack.c.l.b16 %v634
    %v1378 = vunpack.c.h.b16 %v634
    %v1379 = vunpack.c.l.b16 %v635
    %v1380 = vunpack.c.h.b16 %v635
    %v1381 = vunpack.c.l.b16 %v636
    %v1382 = vunpack.c.h.b16 %v636
    %v1383 = vunpack.c.l.b16 %v637
    %v1384 = vunpack.c.h.b16 %v637
    %v1385 = vunpack.c.l.b16 %v638
    %v1386 = vunpack.c.h.b16 %v638
    %v1387 = vunpack.c.l.b16 %v639
    %v1388 = vunpack.c.h.b16 %v639
    %v1389 = vunpack.c.l.b16 %v640
    %v1390 = vunpack.c.h.b16 %v640
    %v1391 = vunpack.c.l.b16 %v641
    %v1392 = vunpack.c.h.b16 %v641
    %v1393 = vunpack.c.l.b16 %v642
    %v1394 = vunpack.c.h.b16 %v642
    %v1395 = vunpack.c.l.b16 %v643
    %v1396 = vunpack.c.h.b16 %v643
    %v1397 = vunpack.c.l.b16 %v644
    %v1398 = vunpack.c.h.b16 %v644
    %v1399 = vunpack.c.l.b16 %v645
    %v1400 = vunpack.c.h.b16 %v645
    %v1401 = vunpack.c.l.b16 %v646
    %v1402 = vunpack.c.h.b16 %v646
    %v1403 = vunpack.c.l.b16 %v647
    %v1404 = vunpack.c.h.b16 %v647
    %v1405 = vunpack.c.l.b16 %v648
    %v1406 = vunpack.c.h.b16 %v648
    %v1407 = vunpack.c.l.b16 %v649
    %v1408 = vunpack.c.h.b16 %v649
    %v1409 = vunpack.c.l.b16 %v650
    %v1410 = vunpack.c.h.b16 %v650
    %v1411 = vunpack.c.l.b16 %v651
    %v1412 = vunpack.c.h.b16 %v651
    %v1413 = vunpack.c.l.b16 %v652
    %v1414 = vunpack.c.h.b16 %v652
    %v1415 = vunpack.c.l.b16 %v653
    %v1416 = vunpack.c.h.b16 %v653
    %v1417 = vunpack.c.l.b16 %v654
    %v1418 = vunpack.c.h.b16 %v654
    %v1419 = vunpack.c.l.b16 %v655
    %v1420 = vunpack.c.h.b16 %v655
    %v1421 = vunpack.c.l.b16 %v656
    %v1422 = vunpack.c.h.b16 %v656
    %v1423 = vunpack.c.l.b16 %v657
    %v1424 = vunpack.c.h.b16 %v657
    %v1425 = vunpack.c.l.b16 %v658
    %v1426 = vunpack.c.h.b16 %v658
    %v1427 = vunpack.c.l.b16 %v659
    %v1428 = vunpack.c.h.b16 %v659
    %v1429 = vunpack.c.l.b16 %v660
    %v1430 = vunpack.c.h.b16 %v660
    %v1431 = vunpack.c.l.b16 %v661
    %v1432 = vunpack.c.h.b16 %v661
    %v1433 = vunpack.c.l.b16 %v662
    %v1434 = vunpack.c.h.b16 %v662
    %v1435 = vunpack.c.l.b16 %v663
    %v1436 = vunpack.c.h.b16 %v663
    %v1437 = vunpack.c.l.b16 %v664
    %v1438 = vunpack.c.h.b16 %v664
    %v1439 = vunpack.c.l.b16 %v665
    %v1440 = vunpack.c.h.b16 %v665
    %v1441 = vunpack.c.l.b16 %v666
    %v1442 = vunpack.c.h.b16 %v666
    %v1443 = vunpack.c.l.b16 %v667
    %v1444 = vunpack.c.h.b16 %v667
    %v1445 = vunpack.c.l.b16 %v668
    %v1446 = vunpack.c.h.b16 %v668
    %v1447 = vunpack.c.l.b16 %v669
    %v1448 = vunpack.c.h.b16 %v669
    %v1449 = vunpack.c.l.b16 %v670
    %v1450 = vunpack.c.h.b16 %v670
    %v1451 = vunpack.c.l.b16 %v671
    %v1452 = vunpack.c.h.b16 %v671
    %v1453 = vunpack.c.l.b16 %v672
    %v1454 = vunpack.c.h.b16 %v672
    %v1455 = vunpack.c.l.b16 %v673
    %v1456 = vunpack.c.h.b16 %v673
    %v1457 = vunpack.c.l.b16 %v674
    %v1458 = vunpack.c.h.b16 %v674
    %v1459 = vunpack.c.l.b16 %v675
    %v1460 = vunpack.c.h.b16 %v675
    %v1461 = vunpack.c.l.b16 %v676
    %v1462 = vunpack.c.h.b16 %v676
    %v1463 = vunpack.c.l.b16 %v677
    %v1464 = vunpack.c.h.b16 %v677
    %v1465 = vunpack.c.l.b16 %v678
    %v1466 = vunpack.c.h.b16 %v678
    %v1467 = vunpack.c.l.b16 %v679
    %v1468 = vunpack.c.h.b16 %v679
    %v1469 = vunpack.c.l.b16 %v680
    %v1470 = vunpack.c.h.b16 %v680
    %v1471 = vunpack.c.l.b16 %v681
    %v1472 = vunpack.c.h.b16 %v681
    %v1473 = vunpack.c.l.b16 %v682
    %v1474 = vunpack.c.h.b16 %v682
    %v1475 = vunpack.c.l.b16 %v683
    %v1476 = vunpack.c.h.b16 %v683
    %v1477 = vunpack.c.l.b16 %v684
    %v1478 = vunpack.c.h.b16 %v684
    %v1479 = vunpack.c.l.b16 %v685
    %v1480 = vunpack.c.h.b16 %v685
    %v1481 = vunpack.c.l.b16 %v686
    %v1482 = vunpack.c.h.b16 %v686
    %v1483 = vunpack.c.l.b16 %v687
    %v1484 = vunpack.c.h.b16 %v687
    %v1485 = vunpack.c.l.b16 %v688
    %v1486 = vunpack.c.h.b16 %v688
    %v1487 = vunpack.c.l.b16 %v689
    %v1488 = vunpack.c.h.b16 %v689
    %v1489 = vunpack.c.l.b16 %v690
    %v1490 = vunpack.c.h.b16 %v690
    %v1491 = vunpack.c.l.b16 %v691
    %v1492 = vunpack.c.h.b16 %v691
    %v1493 = vunpack.c.l.b16 %v692
    %v1494 = vunpack.c.h.b16 %v692
    %v1495 = vunpack.c.l.b16 %v693
    %v1496 = vunpack.c.h.b16 %v693
    %v1497 = vunpack.c.l.b16 %v694
    %v1498 = vunpack.c.h.b16 %v694
    %v1499 = vunpack.c.l.b16 %v695
    %v1500 = vunpack.c.h.b16 %v695
    %v1501 = vunpack.c.l.b16 %v696
    %v1502 = vunpack.c.h.b16 %v696
    %v1503 = vunpack.c.l.b16 %v697
    %v1504 = vunpack.c.h.b16 %v697
    %v1505 = vunpack.c.l.b16 %v698
    %v1506 = vunpack.c.h.b16 %v698
    %v1507 = vunpack.c.l.b16 %v699
    %v1508 = vunpack.c.h.b16 %v699
    %v1509 = vunpack.c.l.b16 %v700
    %v1510 = vunpack.c.h.b16 %v700
    %v1511 = vunpack.c.l.b16 %v701
    %v1512 = vunpack.c.h.b16 %v701
    %v1513 = vunpack.c.l.b16 %v702
    %v1514 = vunpack.c.h.b16 %v702
    %v1515 = vunpack.c.l.b16 %v703
    %v1516 = vunpack.c.h.b16 %v703
    %v1517 = vunpack.c.l.b16 %v704
    %v1518 = vunpack.c.h.b16 %v704
    %v1519 = vunpack.c.l.b16 %v705
    %v1520 = vunpack.c.h.b16 %v705
    %v1521 = vunpack.c.l.b16 %v706
    %v1522 = vunpack.c.h.b16 %v706
    %v1523 = vunpack.c.l.b16 %v707
    %v1524 = vunpack.c.h.b16 %v707
    %v1525 = vunpack.c.l.b16 %v708
    %v1526 = vunpack.c.h.b16 %v708
    %v1527 = vunpack.c.l.b16 %v709
    %v1528 = vunpack.c.h.b16 %v709
    %v1529 = vunpack.c.l.b16 %v710
    %v1530 = vunpack.c.h.b16 %v710
    %v1531 = vunpack.c.l.b16 %v711
    %v1532 = vunpack.c.h.b16 %v711
    %v1533 = vunpack.c.l.b16 %v712
    %v1534 = vunpack.c.h.b16 %v712
    %v1535 = vunpack.c.l.b16 %v713
    %v1536 = vunpack.c.h.b16 %v713
    %v1537 = vunpack.c.l.b16 %v714
    %v1538 = vunpack.c.h.b16 %v714
    %v1539 = vunpack.c.l.b16 %v715
    %v1540 = vunpack.c.h.b16 %v715
    %v1541 = vunpack.c.l.b16 %v716
    %v1542 = vunpack.c.h.b16 %v716
    %v1543 = vunpack.c.l.b16 %v717
    %v1544 = vunpack.c.h.b16 %v717
    %v1545 = vunpack.c.l.b16 %v718
    %v1546 = vunpack.c.h.b16 %v718
    %v1547 = vunpack.c.l.b16 %v719
    %v1548 = vunpack.c.h.b16 %v719
    %v1549 = vunpack.c.l.b16 %v720
    %v1550 = vunpack.c.h.b16 %v720
    %v1551 = vunpack.c.l.b16 %v721
    %v1552 = vunpack.c.h.b16 %v721
    %v1553 = vunpack.c.l.b16 %v722
    %v1554 = vunpack.c.h.b16 %v722
    %v1555 = vunpack.c.l.b16 %v723
    %v1556 = vunpack.c.h.b16 %v723
    %v1557 = vunpack.c.l.b16 %v724
    %v1558 = vunpack.c.h.b16 %v724
    %v1559 = vunpack.c.l.b16 %v725
    %v1560 = vunpack.c.h.b16 %v725
    %v1561 = vunpack.c.l.b16 %v726
    %v1562 = vunpack.c.h.b16 %v726
    %v1563 = vunpack.c.l.b16 %v727
    %v1564 = vunpack.c.h.b16 %v727
    %v1565 = vunpack.c.l.b16 %v728
    %v1566 = vunpack.c.h.b16 %v728
    %v1567 = vunpack.c.l.b16 %v729
    %v1568 = vunpack.c.h.b16 %v729
    %v1569 = vunpack.c.l.b16 %v730
    %v1570 = vunpack.c.h.b16 %v730
    %v1571 = vunpack.c.l.b16 %v731
    %v1572 = vunpack.c.h.b16 %v731
    %v1573 = vunpack.c.l.b16 %v732
    %v1574 = vunpack.c.h.b16 %v732
    %v1575 = vunpack.c.l.b16 %v733
    %v1576 = vunpack.c.h.b16 %v733
    %v1577 = vunpack.c.l.b16 %v734
    %v1578 = vunpack.c.h.b16 %v734
    %v1579 = vunpack.c.l.b16 %v735
    %v1580 = vunpack.c.h.b16 %v735
    %v1581 = vunpack.c.l.b16 %v736
    %v1582 = vunpack.c.h.b16 %v736
    %v1583 = vunpack.c.l.b16 %v737
    %v1584 = vunpack.c.h.b16 %v737
    %v1585 = vunpack.c.l.b16 %v738
    %v1586 = vunpack.c.h.b16 %v738
    %v1587 = vunpack.c.l.b16 %v739
    %v1588 = vunpack.c.h.b16 %v739
    %v1589 = vunpack.c.l.b16 %v740
    %v1590 = vunpack.c.h.b16 %v740
    %v1591 = vunpack.c.l.b16 %v741
    %v1592 = vunpack.c.h.b16 %v741
    %v1593 = vunpack.c.l.b16 %v742
    %v1594 = vunpack.c.h.b16 %v742
    %v1595 = vpack.c.b16 %v1099, %v1083
    %v1596 = vpack.c.b16 %v1100, %v1084
    %v1597 = vpack.c.b16 %v1101, %v1085
    %v1598 = vpack.c.b16 %v1102, %v1086
    %v1599 = vpack.c.b16 %v1103, %v1087
    %v1600 = vpack.c.b16 %v1104, %v1088
    %v1601 = vpack.c.b16 %v1105, %v1089
    %v1602 = vpack.c.b16 %v1106, %v1090
    %v1603 = vpack.c.b16 %v1107, %v1091
    %v1604 = vpack.c.b16 %v1108, %v1092
    %v1605 = vpack.c.b16 %v1109, %v1093
    %v1606 = vpack.c.b16 %v1110, %v1094
    %v1607 = vpack.c.b16 %v1111, %v1095
    %v1608 = vpack.c.b16 %v1112, %v1096
    %v1609 = vpack.c.b16 %v1113, %v1097
    %v1610 = vpack.c.b16 %v1114, %v1098
    %v1611 = vpack.c.b16 %v1131, %v1115
    %v1612 = vpack.c.b16 %v1132, %v1116
    %v1613 = vpack.c.b16 %v1133, %v1117
    %v1614 = vpack.c.b16 %v1134, %v1118
    %v1615 = vpack.c.b16 %v1135, %v1119
    %v1616 = vpack.c.b16 %v1136, %v1120
    %v1617 = vpack.c.b16 %v1137, %v1121
    %v1618 = vpack.c.b16 %v1138, %v1122
    %v1619 = vpack.c.b16 %v1139, %v1123
    %v1620 = vpack.c.b16 %v1140, %v1124
    %v1621 = vpack.c.b16 %v1141, %v1125
    %v1622 = vpack.c.b16 %v1142, %v1126
    %v1623 = vpack.c.b16 %v1143, %v1127
    %v1624 = vpack.c.b16 %v1144, %v1128
    %v1625 = vpack.c.b16 %v1145, %v1129
    %v1626 = vpack.c.b16 %v1146, %v1130
    %v1627 = vpack.c.b16 %v1163, %v1147
    %v1628 = vpack.c.b16 %v1164, %v1148
    %v1629 = vpack.c.b16 %v1165, %v1149
    %v1630 = vpack.c.b16 %v1166, %v1150
    %v1631 = vpack.c.b16 %v1167, %v1151
    %v1632 = vpack.c.b16 %v1168, %v1152
    %v1633 = vpack.c.b16 %v1169, %v1153
    %v1634 = vpack.c.b16 %v1170, %v1154
    %v1635 = vpack.c.b16 %v1171, %v1155
    %v1636 = vpack.c.b16 %v1172, %v1156
    %v1637 = vpack.c.b16 %v1173, %v1157
    %v1638 = vpack.c.b16 %v1174, %v1158
    %v1639 = vpack.c.b16 %v1175, %v1159
    %v1640 = vpack.c.b16 %v1176, %v1160
    %v1641 = vpack.c.b16 %v1177, %v1161
    %v1642 = vpack.c.b16 %v1178, %v1162
    %v1643 = vpack.c.b16 %v1195, %v1179
    %v1644 = vpack.c.b16 %v1196, %v1180
    %v1645 = vpack.c.b16 %v1197, %v1181
    %v1646 = vpack.c.b16 %v1198, %v1182
    %v1647 = vpack.c.b16 %v1199, %v1183
    %v1648 = vpack.c.b16 %v1200, %v1184
    %v1649 = vpack.c.b16 %v1201, %v1185
    %v1650 = vpack.c.b16 %v1202, %v1186
    %v1651 = vpack.c.b16 %v1203, %v1187
    %v1652 = vpack.c.b16 %v1204, %v1188
    %v1653 = vpack.c.b16 %v1205, %v1189
    %v1654 = vpack.c.b16 %v1206, %v1190
    %v1655 = vpack.c.b16 %v1207, %v1191
    %v1656 = vpack.c.b16 %v1208, %v1192
    %v1657 = vpack.c.b16 %v1209, %v1193
    %v1658 = vpack.c.b16 %v1210, %v1194
    %v1659 = vpack.c.b16 %v1227, %v1211
    %v1660 = vpack.c.b16 %v1228, %v1212
    %v1661 = vpack.c.b16 %v1229, %v1213
    %v1662 = vpack.c.b16 %v1230, %v1214
    %v1663 = vpack.c.b16 %v1231, %v1215
    %v1664 = vpack.c.b16 %v1232, %v1216
    %v1665 = vpack.c.b16 %v1233, %v1217
    %v1666 = vpack.c.b16 %v1234, %v1218
    %v1667 = vpack.c.b16 %v1235, %v1219
    %v1668 = vpack.c.b16 %v1236, %v1220
    %v1669 = vpack.c.b16 %v1237, %v1221
    %v1670 = vpack.c.b16 %v1238, %v1222
    %v1671 = vpack.c.b16 %v1239, %v1223
    %v1672 = vpack.c.b16 %v1240, %v1224
    %v1673 = vpack.c.b16 %v1241, %v1225
    %v1674 = vpack.c.b16 %v1242, %v1226
    %v1675 = vpack.c.b16 %v1259, %v1243
    %v1676 = vpack.c.b16 %v1260, %v1244
    %v1677 = vpack.c.b16 %v1261, %v1245
    %v1678 = vpack.c.b16 %v1262, %v1246
    %v1679 = vpack.c.b16 %v1263, %v1247
    %v1680 = vpack.c.b16 %v1264, %v1248
    %v1681 = vpack.c.b16 %v1265, %v1249
    %v1682 = vpack.c.b16 %v1266, %v1250
    %v1683 = vpack.c.b16 %v1267, %v1251
    %v1684 = vpack.c.b16 %v1268, %v1252
    %v1685 = vpack.c.b16 %v1269, %v1253
    %v1686 = vpack.c.b16 %v1270, %v1254
    %v1687 = vpack.c.b16 %v1271, %v1255
    %v1688 = vpack.c.b16 %v1272, %v1256
    %v1689 = vpack.c.b16 %v1273, %v1257
    %v1690 = vpack.c.b16 %v1274, %v1258
    %v1691 = vpack.c.b16 %v1291, %v1275
    %v1692 = vpack.c.b16 %v1292, %v1276
    %v1693 = vpack.c.b16 %v1293, %v1277
    %v1694 = vpack.c.b16 %v1294, %v1278
    %v1695 = vpack.c.b16 %v1295, %v1279
    %v1696 = vpack.c.b16 %v1296, %v1280
    %v1697 = vpack.c.b16 %v1297, %v1281
    %v1698 = vpack.c.b16 %v1298, %v1282
    %v1699 = vpack.c.b16 %v1299, %v1283
    %v1700 = vpack.c.b16 %v1300, %v1284
    %v1701 = vpack.c.b16 %v1301, %v1285
    %v1702 = vpack.c.b16 %v1302, %v1286
    %v1703 = vpack.c.b16 %v1303, %v1287
    %v1704 = vpack.c.b16 %v1304, %v1288
    %v1705 = vpack.c.b16 %v1305, %v1289
    %v1706 = vpack.c.b16 %v1306, %v1290
    %v1707 = vpack.c.b16 %v1323, %v1307
    %v1708 = vpack.c.b16 %v1324, %v1308
    %v1709 = vpack.c.b16 %v1325, %v1309
    %v1710 = vpack.c.b16 %v1326, %v1310
    %v1711 = vpack.c.b16 %v1327, %v1311
    %v1712 = vpack.c.b16 %v1328, %v1312
    %v1713 = vpack.c.b16 %v1329, %v1313
    %v1714 = vpack.c.b16 %v1330, %v1314
    %v1715 = vpack.c.b16 %v1331, %v1315
    %v1716 = vpack.c.b16 %v1332, %v1316
    %v1717 = vpack.c.b16 %v1333, %v1317
    %v1718 = vpack.c.b16 %v1334, %v1318
    %v1719 = vpack.c.b16 %v1335, %v1319
    %v1720 = vpack.c.b16 %v1336, %v1320
    %v1721 = vpack.c.b16 %v1337, %v1321
    %v1722 = vpack.c.b16 %v1338, %v1322
    %v1723 = vpack.c.b16 %v1355, %v1339
    %v1724 = vpack.c.b16 %v1356, %v1340
    %v1725 = vpack.c.b16 %v1357, %v1341
    %v1726 = vpack.c.b16 %v1358, %v1342
    %v1727 = vpack.c.b16 %v1359, %v1343
    %v1728 = vpack.c.b16 %v1360, %v1344
    %v1729 = vpack.c.b16 %v1361, %v1345
    %v1730 = vpack.c.b16 %v1362, %v1346
    %v1731 = vpack.c.b16 %v1363, %v1347
    %v1732 = vpack.c.b16 %v1364, %v1348
    %v1733 = vpack.c.b16 %v1365, %v1349
    %v1734 = vpack.c.b16 %v1366, %v1350
    %v1735 = vpack.c.b16 %v1367, %v1351
    %v1736 = vpack.c.b16 %v1368, %v1352
    %v1737 = vpack.c.b16 %v1369, %v1353
    %v1738 = vpack.c.b16 %v1370, %v1354
    %v1739 = vpack.c.b16 %v1387, %v1371
    %v1740 = vpack.c.b16 %v1388, %v1372
    %v1741 = vpack.c.b16 %v1389, %v1373
    %v1742 = vpack.c.b16 %v1390, %v1374
    %v1743 = vpack.c.b16 %v1391, %v1375
    %v1744 = vpack.c.b16 %v1392, %v1376
    %v1745 = vpack.c.b16 %v1393, %v1377
    %v1746 = vpack.c.b16 %v1394, %v1378
    %v1747 = vpack.c.b16 %v1395, %v1379
    %v1748 = vpack.c.b16 %v1396, %v1380
    %v1749 = vpack.c.b16 %v1397, %v1381
    %v1750 = vpack.c.b16 %v1398, %v1382
    %v1751 = vpack.c.b16 %v1399, %v1383
    %v1752 = vpack.c.b16 %v1400, %v1384
    %v1753 = vpack.c.b16 %v1401, %v1385
    %v1754 = vpack.c.b16 %v1402, %v1386
    %v1755 = vpack.c.b16 %v1419, %v1403
    %v1756 = vpack.c.b16 %v1420, %v1404
    %v1757 = vpack.c.b16 %v1421, %v1405
    %v1758 = vpack.c.b16 %v1422, %v1406
    %v1759 = vpack.c.b16 %v1423, %v1407
    %v1760 = vpack.c.b16 %v1424, %v1408
    %v1761 = vpack.c.b16 %v1425, %v1409
    %v1762 = vpack.c.b16 %v1426, %v1410
    %v1763 = vpack.c.b16 %v1427, %v1411
    %v1764 = vpack.c.b16 %v1428, %v1412
    %v1765 = vpack.c.b16 %v1429, %v1413
    %v1766 = vpack.c.b16 %v1430, %v1414
    %v1767 = vpack.c.b16 %v1431, %v1415
    %v1768 = vpack.c.b16 %v1432, %v1416
    %v1769 = vpack.c.b16 %v1433, %v1417
    %v1770 = vpack.c.b16 %v1434, %v1418
    %v1771 = vpack.c.b16 %v1451, %v1435
    %v1772 = vpack.c.b16 %v1452, %v1436
    %v1773 = vpack.c.b16 %v1453, %v1437
    %v1774 = vpack.c.b16 %v1454, %v1438
    %v1775 = vpack.c.b16 %v1455, %v1439
    %v1776 = vpack.c.b16 %v1456, %v1440
    %v1777 = vpack.c.b16 %v1457, %v1441
    %v1778 = vpack.c.b16 %v1458, %v1442
    %v1779 = vpack.c.b16 %v1459, %v1443
    %v1780 = vpack.c.b16 %v1460, %v1444
    %v1781 = vpack.c.b16 %v1461, %v1445
    %v1782 = vpack.c.b16 %v1462, %v1446
    %v1783 = vpack.c.b16 %v1463, %v1447
    %v1784 = vpack.c.b16 %v1464, %v1448
    %v1785 = vpack.c.b16 %v1465, %v1449
    %v1786 = vpack.c.b16 %v1466, %v1450
    %v1787 = vpack.c.b16 %v1483, %v1467
    %v1788 = vpack.c.b16 %v1484, %v1468
    %v1789 = vpack.c.b16 %v1485, %v1469
    %v1790 = vpack.c.b16 %v1486, %v1470
    %v1791 = vpack.c.b16 %v1487, %v1471
    %v1792 = vpack.c.b16 %v1488, %v1472
    %v1793 = vpack.c.b16 %v1489, %v1473
    %v1794 = vpack.c.b16 %v1490, %v1474
    %v1795 = vpack.c.b16 %v1491, %v1475
    %v1796 = vpack.c.b16 %v1492, %v1476
    %v1797 = vpack.c.b16 %v1493, %v1477
    %v1798 = vpack.c.b16 %v1494, %v1478
    %v1799 = vpack.c.b16 %v1495, %v1479
    %v1800 = vpack.c.b16 %v1496, %v1480
    %v1801 = vpack.c.b16 %v1497, %v1481
    %v1802 = vpack.c.b16 %v1498, %v1482
    %v1803 = vpack.c.b16 %v1515, %v1499
    %v1804 = vpack.c.b16 %v1516, %v1500
    %v1805 = vpack.c.b16 %v1517, %v1501
    %v1806 = vpack.c.b16 %v1518, %v1502
    %v1807 = vpack.c.b16 %v1519, %v1503
    %v1808 = vpack.c.b16 %v1520, %v1504
    %v1809 = vpack.c.b16 %v1521, %v1505
    %v1810 = vpack.c.b16 %v1522, %v1506
    %v1811 = vpack.c.b16 %v1523, %v1507
    %v1812 = vpack.c.b16 %v1524, %v1508
    %v1813 = vpack.c.b16 %v1525, %v1509
    %v1814 = vpack.c.b16 %v1526, %v1510
    %v1815 = vpack.c.b16 %v1527, %v1511
    %v1816 = vpack.c.b16 %v1528, %v1512
    %v1817 = vpack.c.b16 %v1529, %v1513
    %v1818 = vpack.c.b16 %v1530, %v1514
    %v1819 = vpack.c.b16 %v1547, %v1531
    %v1820 = vpack.c.b16 %v1548, %v1532
    %v1821 = vpack.c.b16 %v1549, %v1533
    %v1822 = vpack.c.b16 %v1550, %v1534
    %v1823 = vpack.c.b16 %v1551, %v1535
    %v1824 = vpack.c.b16 %v1552, %v1536
    %v1825 = vpack.c.b16 %v1553, %v1537
    %v1826 = vpack.c.b16 %v1554, %v1538
    %v1827 = vpack.c.b16 %v1555, %v1539
    %v1828 = vpack.c.b16 %v1556, %v1540
    %v1829 = vpack.c.b16 %v1557, %v1541
    %v1830 = vpack.c.b16 %v1558, %v1542
    %v1831 = vpack.c.b16 %v1559, %v1543
    %v1832 = vpack.c.b16 %v1560, %v1544
    %v1833 = vpack.c.b16 %v1561, %v1545
    %v1834 = vpack.c.b16 %v1562, %v1546
    %v1835 = vpack.c.b16 %v1579, %v1563
    %v1836 = vpack.c.b16 %v1580, %v1564
    %v1837 = vpack.c.b16 %v1581, %v1565
    %v1838 = vpack.c.b16 %v1582, %v1566
    %v1839 = vpack.c.b16 %v1583, %v1567
    %v1840 = vpack.c.b16 %v1584, %v1568
    %v1841 = vpack.c.b16 %v1585, %v1569
    %v1842 = vpack.c.b16 %v1586, %v1570
    %v1843 = vpack.c.b16 %v1587, %v1571
    %v1844 = vpack.c.b16 %v1588, %v1572
    %v1845 = vpack.c.b16 %v1589, %v1573
    %v1846 = vpack.c.b16 %v1590, %v1574
    %v1847 = vpack.c.b16 %v1591, %v1575
    %v1848 = vpack.c.b16 %v1592, %v1576
    %v1849 = vpack.c.b16 %v1593, %v1577
    %v1850 = vpack.c.b16 %v1594, %v1578
    %2107 = vmatprep.subr.bf16.mxu0 %v1596
    %2108 = vmatpush1.bf16.msra.mxu0 %v1595
    %2109 = vmatprep.subr.bf16.mxu0 %v1612
    %2110 = vmatpush1.bf16.msra.mxu0 %v1611
    %2111 = vmatprep.subr.bf16.mxu0 %v1628
    %2112 = vmatpush1.bf16.msra.mxu0 %v1627
    %2113 = vmatprep.subr.bf16.mxu0 %v1644
    %2114 = vmatpush1.bf16.msra.mxu0 %v1643
    %2115 = vmatprep.subr.bf16.mxu0 %v1660
    %2116 = vmatpush1.bf16.msra.mxu0 %v1659
    %2117 = vmatprep.subr.bf16.mxu0 %v1676
    %2118 = vmatpush1.bf16.msra.mxu0 %v1675
    %2119 = vmatprep.subr.bf16.mxu0 %v1692
    %2120 = vmatpush1.bf16.msra.mxu0 %v1691
    %2121 = vmatprep.subr.bf16.mxu0 %v1708
    %2122 = vmatpush1.bf16.msra.mxu0 %v1707
    %2123 = vmatprep.subr.bf16.mxu0 %v1724
    %2124 = vmatpush1.bf16.msra.mxu0 %v1723
    %2125 = vmatprep.subr.bf16.mxu0 %v1740
    %2126 = vmatpush1.bf16.msra.mxu0 %v1739
    %2127 = vmatprep.subr.bf16.mxu0 %v1756
    %2128 = vmatpush1.bf16.msra.mxu0 %v1755
    %2129 = vmatprep.subr.bf16.mxu0 %v1772
    %2130 = vmatpush1.bf16.msra.mxu0 %v1771
    %2131 = vmatprep.subr.bf16.mxu0 %v1788
    %2132 = vmatpush1.bf16.msra.mxu0 %v1787
    %2133 = vmatprep.subr.bf16.mxu0 %v1804
    %2134 = vmatpush1.bf16.msra.mxu0 %v1803
    %2135 = vmatprep.subr.bf16.mxu0 %v1820
    %2136 = vmatpush1.bf16.msra.mxu0 %v1819
    %2137 = vmatprep.subr.bf16.mxu0 %v1836
    %2138 = vmatpush1.bf16.msra.mxu0 %v1835
    %2139 = vmatprep.mubr.bf16.mxu0 %v486
    %2140 = vmatmul.mubr.bf16.gmra.mrb[0].mxu0 %v485
    %v2141 = vpop.f32.mrb[0].mxu0
    %v2142 = vadd.f32 %v750, %v2141
    %v2143 = vpop.f32.mrb[0].mxu0
    %v2144 = vadd.f32 %v754, %v2143
    %v2145 = vpop.f32.mrb[0].mxu0
    %v2146 = vpop.f32.mrb[0].mxu0
    %2147 = vdwg.mxu0
    %2148 = vmatprep.subr.bf16.mxu0 %v1598
    %2149 = vmatpush1.bf16.msra.mxu0 %v1597
    %2150 = vmatprep.subr.bf16.mxu0 %v1614
    %2151 = vmatpush1.bf16.msra.mxu0 %v1613
    %2152 = vmatprep.subr.bf16.mxu0 %v1630
    %2153 = vmatpush1.bf16.msra.mxu0 %v1629
    %2154 = vmatprep.subr.bf16.mxu0 %v1646
    %2155 = vmatpush1.bf16.msra.mxu0 %v1645
    %2156 = vmatprep.subr.bf16.mxu0 %v1662
    %2157 = vmatpush1.bf16.msra.mxu0 %v1661
    %2158 = vmatprep.subr.bf16.mxu0 %v1678
    %2159 = vmatpush1.bf16.msra.mxu0 %v1677
    %2160 = vmatprep.subr.bf16.mxu0 %v1694
    %2161 = vmatpush1.bf16.msra.mxu0 %v1693
    %2162 = vmatprep.subr.bf16.mxu0 %v1710
    %2163 = vmatpush1.bf16.msra.mxu0 %v1709
    %2164 = vmatprep.subr.bf16.mxu0 %v1726
    %2165 = vmatpush1.bf16.msra.mxu0 %v1725
    %2166 = vmatprep.subr.bf16.mxu0 %v1742
    %2167 = vmatpush1.bf16.msra.mxu0 %v1741
    %2168 = vmatprep.subr.bf16.mxu0 %v1758
    %2169 = vmatpush1.bf16.msra.mxu0 %v1757
    %2170 = vmatprep.subr.bf16.mxu0 %v1774
    %2171 = vmatpush1.bf16.msra.mxu0 %v1773
    %2172 = vmatprep.subr.bf16.mxu0 %v1790
    %2173 = vmatpush1.bf16.msra.mxu0 %v1789
    %2174 = vmatprep.subr.bf16.mxu0 %v1806
    %2175 = vmatpush1.bf16.msra.mxu0 %v1805
    %2176 = vmatprep.subr.bf16.mxu0 %v1822
    %2177 = vmatpush1.bf16.msra.mxu0 %v1821
    %2178 = vmatprep.subr.bf16.mxu0 %v1838
    %2179 = vmatpush1.bf16.msra.mxu0 %v1837
    %2180 = vmatprep.mubr.bf16.mxu0 %v486
    %2181 = vmatmul.mubr.bf16.gmra.mrb[0].mxu0 %v485
    %v2182 = vpop.f32.mrb[0].mxu0
    %v2183 = vadd.f32 %v758, %v2182
    %v2184 = vpop.f32.mrb[0].mxu0
    %v2185 = vadd.f32 %v762, %v2184
    %v2186 = vpop.f32.mrb[0].mxu0
    %v2187 = vpop.f32.mrb[0].mxu0
    %2188 = vdwg.mxu0
    %2189 = vmatprep.subr.bf16.mxu0 %v1600
    %2190 = vmatpush1.bf16.msra.mxu0 %v1599
    %2191 = vmatprep.subr.bf16.mxu0 %v1616
    %2192 = vmatpush1.bf16.msra.mxu0 %v1615
    %2193 = vmatprep.subr.bf16.mxu0 %v1632
    %2194 = vmatpush1.bf16.msra.mxu0 %v1631
    %2195 = vmatprep.subr.bf16.mxu0 %v1648
    %2196 = vmatpush1.bf16.msra.mxu0 %v1647
    %2197 = vmatprep.subr.bf16.mxu0 %v1664
    %2198 = vmatpush1.bf16.msra.mxu0 %v1663
    %2199 = vmatprep.subr.bf16.mxu0 %v1680
    %2200 = vmatpush1.bf16.msra.mxu0 %v1679
    %2201 = vmatprep.subr.bf16.mxu0 %v1696
    %2202 = vmatpush1.bf16.msra.mxu0 %v1695
    %2203 = vmatprep.subr.bf16.mxu0 %v1712
    %2204 = vmatpush1.bf16.msra.mxu0 %v1711
    %2205 = vmatprep.subr.bf16.mxu0 %v1728
    %2206 = vmatpush1.bf16.msra.mxu0 %v1727
    %2207 = vmatprep.subr.bf16.mxu0 %v1744
    %2208 = vmatpush1.bf16.msra.mxu0 %v1743
    %2209 = vmatprep.subr.bf16.mxu0 %v1760
    %2210 = vmatpush1.bf16.msra.mxu0 %v1759
    %2211 = vmatprep.subr.bf16.mxu0 %v1776
    %2212 = vmatpush1.bf16.msra.mxu0 %v1775
    %2213 = vmatprep.subr.bf16.mxu0 %v1792
    %2214 = vmatpush1.bf16.msra.mxu0 %v1791
    %2215 = vmatprep.subr.bf16.mxu0 %v1808
    %2216 = vmatpush1.bf16.msra.mxu0 %v1807
    %2217 = vmatprep.subr.bf16.mxu0 %v1824
    %2218 = vmatpush1.bf16.msra.mxu0 %v1823
    %2219 = vmatprep.subr.bf16.mxu0 %v1840
    %2220 = vmatpush1.bf16.msra.mxu0 %v1839
    %2221 = vmatprep.mubr.bf16.mxu0 %v486
    %2222 = vmatmul.mubr.bf16.gmra.mrb[0].mxu0 %v485
    %v2223 = vpop.f32.mrb[0].mxu0
    %v2224 = vadd.f32 %v766, %v2223
    %v2225 = vpop.f32.mrb[0].mxu0
    %v2226 = vadd.f32 %v770, %v2225
    %v2227 = vpop.f32.mrb[0].mxu0
    %v2228 = vpop.f32.mrb[0].mxu0
    %2229 = vdwg.mxu0
    %2230 = vmatprep.subr.bf16.mxu0 %v1602
    %2231 = vmatpush1.bf16.msra.mxu0 %v1601
    %2232 = vmatprep.subr.bf16.mxu0 %v1618
    %2233 = vmatpush1.bf16.msra.mxu0 %v1617
    %2234 = vmatprep.subr.bf16.mxu0 %v1634
    %2235 = vmatpush1.bf16.msra.mxu0 %v1633
    %2236 = vmatprep.subr.bf16.mxu0 %v1650
    %2237 = vmatpush1.bf16.msra.mxu0 %v1649
    %2238 = vmatprep.subr.bf16.mxu0 %v1666
    %2239 = vmatpush1.bf16.msra.mxu0 %v1665
    %2240 = vmatprep.subr.bf16.mxu0 %v1682
    %2241 = vmatpush1.bf16.msra.mxu0 %v1681
    %2242 = vmatprep.subr.bf16.mxu0 %v1698
    %2243 = vmatpush1.bf16.msra.mxu0 %v1697
    %2244 = vmatprep.subr.bf16.mxu0 %v1714
    %2245 = vmatpush1.bf16.msra.mxu0 %v1713
    %2246 = vmatprep.subr.bf16.mxu0 %v1730
    %2247 = vmatpush1.bf16.msra.mxu0 %v1729
    %2248 = vmatprep.subr.bf16.mxu0 %v1746
    %2249 = vmatpush1.bf16.msra.mxu0 %v1745
    %2250 = vmatprep.subr.bf16.mxu0 %v1762
    %2251 = vmatpush1.bf16.msra.mxu0 %v1761
    %2252 = vmatprep.subr.bf16.mxu0 %v1778
    %2253 = vmatpush1.bf16.msra.mxu0 %v1777
    %2254 = vmatprep.subr.bf16.mxu0 %v1794
    %2255 = vmatpush1.bf16.msra.mxu0 %v1793
    %2256 = vmatprep.subr.bf16.mxu0 %v1810
    %2257 = vmatpush1.bf16.msra.mxu0 %v1809
    %2258 = vmatprep.subr.bf16.mxu0 %v1826
    %2259 = vmatpush1.bf16.msra.mxu0 %v1825
    %2260 = vmatprep.subr.bf16.mxu0 %v1842
    %2261 = vmatpush1.bf16.msra.mxu0 %v1841
    %2262 = vmatprep.mubr.bf16.mxu0 %v486
    %2263 = vmatmul.mubr.bf16.gmra.mrb[0].mxu0 %v485
    %v2264 = vpop.f32.mrb[0].mxu0
    %v2265 = vadd.f32 %v774, %v2264
    %v2266 = vpop.f32.mrb[0].mxu0
    %v2267 = vadd.f32 %v778, %v2266
    %v2268 = vpop.f32.mrb[0].mxu0
    %v2269 = vpop.f32.mrb[0].mxu0
    %2270 = vdwg.mxu0
    %2271 = vmatprep.subr.bf16.mxu0 %v1604
    %2272 = vmatpush1.bf16.msra.mxu0 %v1603
    %2273 = vmatprep.subr.bf16.mxu0 %v1620
    %2274 = vmatpush1.bf16.msra.mxu0 %v1619
    %2275 = vmatprep.subr.bf16.mxu0 %v1636
    %2276 = vmatpush1.bf16.msra.mxu0 %v1635
    %2277 = vmatprep.subr.bf16.mxu0 %v1652
    %2278 = vmatpush1.bf16.msra.mxu0 %v1651
    %2279 = vmatprep.subr.bf16.mxu0 %v1668
    %2280 = vmatpush1.bf16.msra.mxu0 %v1667
    %2281 = vmatprep.subr.bf16.mxu0 %v1684
    %2282 = vmatpush1.bf16.msra.mxu0 %v1683
    %2283 = vmatprep.subr.bf16.mxu0 %v1700
    %2284 = vmatpush1.bf16.msra.mxu0 %v1699
    %2285 = vmatprep.subr.bf16.mxu0 %v1716
    %2286 = vmatpush1.bf16.msra.mxu0 %v1715
    %2287 = vmatprep.subr.bf16.mxu0 %v1732
    %2288 = vmatpush1.bf16.msra.mxu0 %v1731
    %2289 = vmatprep.subr.bf16.mxu0 %v1748
    %2290 = vmatpush1.bf16.msra.mxu0 %v1747
    %2291 = vmatprep.subr.bf16.mxu0 %v1764
    %2292 = vmatpush1.bf16.msra.mxu0 %v1763
    %2293 = vmatprep.subr.bf16.mxu0 %v1780
    %2294 = vmatpush1.bf16.msra.mxu0 %v1779
    %2295 = vmatprep.subr.bf16.mxu0 %v1796
    %2296 = vmatpush1.bf16.msra.mxu0 %v1795
    %2297 = vmatprep.subr.bf16.mxu0 %v1812
    %2298 = vmatpush1.bf16.msra.mxu0 %v1811
    %2299 = vmatprep.subr.bf16.mxu0 %v1828
    %2300 = vmatpush1.bf16.msra.mxu0 %v1827
    %2301 = vmatprep.subr.bf16.mxu0 %v1844
    %2302 = vmatpush1.bf16.msra.mxu0 %v1843
    %2303 = vmatprep.mubr.bf16.mxu0 %v486
    %2304 = vmatmul.mubr.bf16.gmra.mrb[0].mxu0 %v485
    %v2305 = vpop.f32.mrb[0].mxu0
    %v2306 = vadd.f32 %v782, %v2305
    %v2307 = vpop.f32.mrb[0].mxu0
    %v2308 = vadd.f32 %v786, %v2307
    %v2309 = vpop.f32.mrb[0].mxu0
    %v2310 = vpop.f32.mrb[0].mxu0
    %2311 = vdwg.mxu0
    %2312 = vmatprep.subr.bf16.mxu0 %v1606
    %2313 = vmatpush1.bf16.msra.mxu0 %v1605
    %2314 = vmatprep.subr.bf16.mxu0 %v1622
    %2315 = vmatpush1.bf16.msra.mxu0 %v1621
    %2316 = vmatprep.subr.bf16.mxu0 %v1638
    %2317 = vmatpush1.bf16.msra.mxu0 %v1637
    %2318 = vmatprep.subr.bf16.mxu0 %v1654
    %2319 = vmatpush1.bf16.msra.mxu0 %v1653
    %2320 = vmatprep.subr.bf16.mxu0 %v1670
    %2321 = vmatpush1.bf16.msra.mxu0 %v1669
    %2322 = vmatprep.subr.bf16.mxu0 %v1686
    %2323 = vmatpush1.bf16.msra.mxu0 %v1685
    %2324 = vmatprep.subr.bf16.mxu0 %v1702
    %2325 = vmatpush1.bf16.msra.mxu0 %v1701
    %2326 = vmatprep.subr.bf16.mxu0 %v1718
    %2327 = vmatpush1.bf16.msra.mxu0 %v1717
    %2328 = vmatprep.subr.bf16.mxu0 %v1734
    %2329 = vmatpush1.bf16.msra.mxu0 %v1733
    %2330 = vmatprep.subr.bf16.mxu0 %v1750
    %2331 = vmatpush1.bf16.msra.mxu0 %v1749
    %2332 = vmatprep.subr.bf16.mxu0 %v1766
    %2333 = vmatpush1.bf16.msra.mxu0 %v1765
    %2334 = vmatprep.subr.bf16.mxu0 %v1782
    %2335 = vmatpush1.bf16.msra.mxu0 %v1781
    %2336 = vmatprep.subr.bf16.mxu0 %v1798
    %2337 = vmatpush1.bf16.msra.mxu0 %v1797
    %2338 = vmatprep.subr.bf16.mxu0 %v1814
    %2339 = vmatpush1.bf16.msra.mxu0 %v1813
    %2340 = vmatprep.subr.bf16.mxu0 %v1830
    %2341 = vmatpush1.bf16.msra.mxu0 %v1829
    %2342 = vmatprep.subr.bf16.mxu0 %v1846
    %2343 = vmatpush1.bf16.msra.mxu0 %v1845
    %2344 = vmatprep.mubr.bf16.mxu0 %v486
    %2345 = vmatmul.mubr.bf16.gmra.mrb[0].mxu0 %v485
    %v2346 = vpop.f32.mrb[0].mxu0
    %v2347 = vadd.f32 %v790, %v2346
    %v2348 = vpop.f32.mrb[0].mxu0
    %v2349 = vadd.f32 %v794, %v2348
    %v2350 = vpop.f32.mrb[0].mxu0
    %v2351 = vpop.f32.mrb[0].mxu0
    %2352 = vdwg.mxu0
    %2353 = vmatprep.subr.bf16.mxu0 %v1608
    %2354 = vmatpush1.bf16.msra.mxu0 %v1607
    %2355 = vmatprep.subr.bf16.mxu0 %v1624
    %2356 = vmatpush1.bf16.msra.mxu0 %v1623
    %2357 = vmatprep.subr.bf16.mxu0 %v1640
    %2358 = vmatpush1.bf16.msra.mxu0 %v1639
    %2359 = vmatprep.subr.bf16.mxu0 %v1656
    %2360 = vmatpush1.bf16.msra.mxu0 %v1655
    %2361 = vmatprep.subr.bf16.mxu0 %v1672
    %2362 = vmatpush1.bf16.msra.mxu0 %v1671
    %2363 = vmatprep.subr.bf16.mxu0 %v1688
    %2364 = vmatpush1.bf16.msra.mxu0 %v1687
    %2365 = vmatprep.subr.bf16.mxu0 %v1704
    %2366 = vmatpush1.bf16.msra.mxu0 %v1703
    %2367 = vmatprep.subr.bf16.mxu0 %v1720
    %2368 = vmatpush1.bf16.msra.mxu0 %v1719
    %2369 = vmatprep.subr.bf16.mxu0 %v1736
    %2370 = vmatpush1.bf16.msra.mxu0 %v1735
    %2371 = vmatprep.subr.bf16.mxu0 %v1752
    %2372 = vmatpush1.bf16.msra.mxu0 %v1751
    %2373 = vmatprep.subr.bf16.mxu0 %v1768
    %2374 = vmatpush1.bf16.msra.mxu0 %v1767
    %2375 = vmatprep.subr.bf16.mxu0 %v1784
    %2376 = vmatpush1.bf16.msra.mxu0 %v1783
    %2377 = vmatprep.subr.bf16.mxu0 %v1800
    %2378 = vmatpush1.bf16.msra.mxu0 %v1799
    %2379 = vmatprep.subr.bf16.mxu0 %v1816
    %2380 = vmatpush1.bf16.msra.mxu0 %v1815
    %2381 = vmatprep.subr.bf16.mxu0 %v1832
    %2382 = vmatpush1.bf16.msra.mxu0 %v1831
    %2383 = vmatprep.subr.bf16.mxu0 %v1848
    %2384 = vmatpush1.bf16.msra.mxu0 %v1847
    %2385 = vmatprep.mubr.bf16.mxu0 %v486
    %2386 = vmatmul.mubr.bf16.gmra.mrb[0].mxu0 %v485
    %v2387 = vpop.f32.mrb[0].mxu0
    %v2388 = vadd.f32 %v798, %v2387
    %v2389 = vpop.f32.mrb[0].mxu0
    %v2390 = vadd.f32 %v802, %v2389
    %v2391 = vpop.f32.mrb[0].mxu0
    %v2392 = vpop.f32.mrb[0].mxu0
    %2393 = vdwg.mxu0
    %2394 = vmatprep.subr.bf16.mxu0 %v1610
    %2395 = vmatpush1.bf16.msra.mxu0 %v1609
    %2396 = vmatprep.subr.bf16.mxu0 %v1626
    %2397 = vmatpush1.bf16.msra.mxu0 %v1625
    %2398 = vmatprep.subr.bf16.mxu0 %v1642
    %2399 = vmatpush1.bf16.msra.mxu0 %v1641
    %2400 = vmatprep.subr.bf16.mxu0 %v1658
    %2401 = vmatpush1.bf16.msra.mxu0 %v1657
    %2402 = vmatprep.subr.bf16.mxu0 %v1674
    %2403 = vmatpush1.bf16.msra.mxu0 %v1673
    %2404 = vmatprep.subr.bf16.mxu0 %v1690
    %2405 = vmatpush1.bf16.msra.mxu0 %v1689
    %2406 = vmatprep.subr.bf16.mxu0 %v1706
    %2407 = vmatpush1.bf16.msra.mxu0 %v1705
    %2408 = vmatprep.subr.bf16.mxu0 %v1722
    %2409 = vmatpush1.bf16.msra.mxu0 %v1721
    %2410 = vmatprep.subr.bf16.mxu0 %v1738
    %2411 = vmatpush1.bf16.msra.mxu0 %v1737
    %2412 = vmatprep.subr.bf16.mxu0 %v1754
    %2413 = vmatpush1.bf16.msra.mxu0 %v1753
    %2414 = vmatprep.subr.bf16.mxu0 %v1770
    %2415 = vmatpush1.bf16.msra.mxu0 %v1769
    %2416 = vmatprep.subr.bf16.mxu0 %v1786
    %2417 = vmatpush1.bf16.msra.mxu0 %v1785
    %2418 = vmatprep.subr.bf16.mxu0 %v1802
    %2419 = vmatpush1.bf16.msra.mxu0 %v1801
    %2420 = vmatprep.subr.bf16.mxu0 %v1818
    %2421 = vmatpush1.bf16.msra.mxu0 %v1817
    %2422 = vmatprep.subr.bf16.mxu0 %v1834
    %2423 = vmatpush1.bf16.msra.mxu0 %v1833
    %2424 = vmatprep.subr.bf16.mxu0 %v1850
    %2425 = vmatpush1.bf16.msra.mxu0 %v1849
    %2426 = vmatprep.mubr.bf16.mxu0 %v486
    %2427 = vmatmul.mubr.bf16.gmra.mrb[0].mxu0 %v485
    %v2428 = vpop.f32.mrb[0].mxu0
    %v2429 = vadd.f32 %v806, %v2428
    %v2430 = vpop.f32.mrb[0].mxu0
    %v2431 = vadd.f32 %v810, %v2430
    %v2432 = vpop.f32.mrb[0].mxu0
    %v2433 = vpop.f32.mrb[0].mxu0
    %2434 = vdwg.mxu0
    %v2435 = vsub.f32 0.0, %v2142
    %v2436 = vsub.f32 0.0, %v2144
    %v2437 = vsub.f32 0.0, %v2183
    %v2438 = vsub.f32 0.0, %v2185
    %v2439 = vsub.f32 0.0, %v2224
    %v2440 = vsub.f32 0.0, %v2226
    %v2441 = vsub.f32 0.0, %v2265
    %v2442 = vsub.f32 0.0, %v2267
    %v2443 = vsub.f32 0.0, %v2306
    %v2444 = vsub.f32 0.0, %v2308
    %v2445 = vsub.f32 0.0, %v2347
    %v2446 = vsub.f32 0.0, %v2349
    %v2447 = vsub.f32 0.0, %v2388
    %v2448 = vsub.f32 0.0, %v2390
    %v2449 = vsub.f32 0.0, %v2429
    %v2450 = vsub.f32 0.0, %v2431
    %v2451 = vmul.f32 %v2435, 1.442695
    %v2452 = vpow.pop %v2451
    %v2453 = vmul.f32 %v2436, 1.442695
    %v2454 = vpow.pop %v2453
    %v2455 = vmul.f32 %v2437, 1.442695
    %v2456 = vpow.pop %v2455
    %v2457 = vmul.f32 %v2438, 1.442695
    %v2458 = vpow.pop %v2457
    %v2459 = vmul.f32 %v2439, 1.442695
    %v2460 = vpow.pop %v2459
    %v2461 = vmul.f32 %v2440, 1.442695
    %v2462 = vpow.pop %v2461
    %v2463 = vmul.f32 %v2441, 1.442695
    %v2464 = vpow.pop %v2463
    %v2465 = vmul.f32 %v2442, 1.442695
    %v2466 = vpow.pop %v2465
    %v2467 = vmul.f32 %v2443, 1.442695
    %v2468 = vpow.pop %v2467
    %v2469 = vmul.f32 %v2444, 1.442695
    %v2470 = vpow.pop %v2469
    %v2471 = vmul.f32 %v2445, 1.442695
    %v2472 = vpow.pop %v2471
    %v2473 = vmul.f32 %v2446, 1.442695
    %v2474 = vpow.pop %v2473
    %v2475 = vmul.f32 %v2447, 1.442695
    %v2476 = vpow.pop %v2475
    %v2477 = vmul.f32 %v2448, 1.442695
    %v2478 = vpow.pop %v2477
    %v2479 = vmul.f32 %v2449, 1.442695
    %v2480 = vpow.pop %v2479
    %v2481 = vmul.f32 %v2450, 1.442695
    %v2482 = vpow.pop %v2481
    %v2483 = vadd.f32 %v2452, 1.0
    %v2484 = vadd.f32 %v2454, 1.0
    %v2485 = vadd.f32 %v2456, 1.0
    %v2486 = vadd.f32 %v2458, 1.0
    %v2487 = vadd.f32 %v2460, 1.0
    %v2488 = vadd.f32 %v2462, 1.0
    %v2489 = vadd.f32 %v2464, 1.0
    %v2490 = vadd.f32 %v2466, 1.0
    %v2491 = vadd.f32 %v2468, 1.0
    %v2492 = vadd.f32 %v2470, 1.0
    %v2493 = vadd.f32 %v2472, 1.0
    %v2494 = vadd.f32 %v2474, 1.0
    %v2495 = vadd.f32 %v2476, 1.0
    %v2496 = vadd.f32 %v2478, 1.0
    %v2497 = vadd.f32 %v2480, 1.0
    %v2498 = vadd.f32 %v2482, 1.0
    %v2499 = vrcp.pop %v2483
    %v2500 = vrcp.pop %v2484
    %v2501 = vrcp.pop %v2485
    %v2502 = vrcp.pop %v2486
    %v2503 = vrcp.pop %v2487
    %v2504 = vrcp.pop %v2488
    %v2505 = vrcp.pop %v2489
    %v2506 = vrcp.pop %v2490
    %v2507 = vrcp.pop %v2491
    %v2508 = vrcp.pop %v2492
    %v2509 = vrcp.pop %v2493
    %v2510 = vrcp.pop %v2494
    %v2511 = vrcp.pop %v2495
    %v2512 = vrcp.pop %v2496
    %v2513 = vrcp.pop %v2497
    %v2514 = vrcp.pop %v2498
    %v2531 = vcombine.low %v2499, %v2500
    %v2532 = vcombine.high %v2499, %v2500
    %v2533 = vcombine.low %v2501, %v2502
    %v2534 = vcombine.high %v2501, %v2502
    %v2535 = vcombine.low %v2503, %v2504
    %v2536 = vcombine.high %v2503, %v2504
    %v2537 = vcombine.low %v2505, %v2506
    %v2538 = vcombine.high %v2505, %v2506
    %v2539 = vcombine.low %v2507, %v2508
    %v2540 = vcombine.high %v2507, %v2508
    %v2541 = vcombine.low %v2509, %v2510
    %v2542 = vcombine.high %v2509, %v2510
    %v2543 = vcombine.low %v2511, %v2512
    %v2544 = vcombine.high %v2511, %v2512
    %v2545 = vcombine.low %v2513, %v2514
    %v2546 = vcombine.high %v2513, %v2514
    %2563 = vst [vmem:[#allocation10] sm:$0xff] %v2531
    %2564 = vst [vmem:[#allocation10 + $0x8] sm:$0xff] %v2533
    %2565 = vst [vmem:[#allocation10 + $0x10] sm:$0xff] %v2535
    %2566 = vst [vmem:[#allocation10 + $0x18] sm:$0xff] %v2537
    %2567 = vst [vmem:[#allocation10 + $0x20] sm:$0xff] %v2539
    %2568 = vst [vmem:[#allocation10 + $0x28] sm:$0xff] %v2541
    %2569 = vst [vmem:[#allocation10 + $0x30] sm:$0xff] %v2543
    %2570 = vst [vmem:[#allocation10 + $0x38] sm:$0xff] %v2545
    %2571 = vst [vmem:[#allocation10 + $0x40] sm:$0xff] %v2532
    %2572 = vst [vmem:[#allocation10 + $0x48] sm:$0xff] %v2534
    %2573 = vst [vmem:[#allocation10 + $0x50] sm:$0xff] %v2536
    %2574 = vst [vmem:[#allocation10 + $0x58] sm:$0xff] %v2538
    %2575 = vst [vmem:[#allocation10 + $0x60] sm:$0xff] %v2540
    %2576 = vst [vmem:[#allocation10 + $0x68] sm:$0xff] %v2542
    %2577 = vst [vmem:[#allocation10 + $0x70] sm:$0xff] %v2544
    %2578 = vst [vmem:[#allocation10 + $0x78] sm:$0xff] %v2546
    // Predicated region
    $region46: #{tpu_custom_call.1} parent=1 // pred_check
      _
    $region47: #{tpu_custom_call.1} parent=1 // pred_check_branch
      %2580 = sbr.rel (0) target = $region49
    $region48: #{tpu_custom_call.1} parent=1 // pred_region
      %s2582 = ssub.s32 2048, 1024
      %2583 = vsyncadd [#allocation4], %s2582
      %s2584 = sshll.u32 [#allocation10], 4
      %s2585 = int_to_ptr.vmem [resolvable:$true] %s2584
      %2590 = dma.vmem_to_hbm [thread:$0]  %s2585, 1024, %s7, [#allocation4], 1024, 1024, 64
    $region49: #{tpu_custom_call.1} parent=1 // pred_fallthru
      _
    // Predicated region
    $region50: #{tpu_custom_call.1} parent=1 // pred_check
      _
    $region51: #{tpu_custom_call.1} parent=1 // pred_check_branch
      %2592 = sbr.rel (0) target = $region53
    $region52: #{tpu_custom_call.1} parent=1 // pred_region
      %2593 = dma.done [#allocation4], 2048
    $region53: #{tpu_custom_call.1} parent=1 // pred_fallthru
      _
    %2594 = vsyncpa [#allocation3], 1
    %2595 = vsyncpa [#allocation6], 1
    %2596 = vsyncpa [#allocation9], 1
    %2597 = vsyncpa [#allocation4], 1

</llo_original>
